<compile_context>
chip_gen: v7x
topology: tpu7x:2x2x1
jax: 0.10.0
libtpu: 0.0.40
codegen_flags: <defaults>
</compile_context>

<pallas_src>
import jax
import jax.numpy as jnp
from jax import lax
from jax.experimental import pallas as pl
from jax.experimental.pallas import tpu as pltpu

_LN_EPS = 1e-5


# ----------------------------------------------------------------------------
# Kernels
# ----------------------------------------------------------------------------
def _ln_relu_step(h, w, b):
    """One Linear -> LayerNorm(no affine) -> ReLU step.

    h: (TB, D) in the compute dtype, w: (D, D) compute dtype, b: (1, D) f32.
    Matmul accumulates in f32 on the MXU; LN/ReLU math stays in f32; the
    result is cast back to the compute dtype for the next step's matmul.
    """
    y = jnp.dot(h, w, preferred_element_type=jnp.float32) + b
    mu = jnp.mean(y, axis=-1, keepdims=True)
    yc = y - mu
    var = jnp.mean(yc * yc, axis=-1, keepdims=True)   # centered (two-pass) var
    yn = yc * lax.rsqrt(var + _LN_EPS)
    return jnp.maximum(yn, 0.0).astype(h.dtype)


def seqnn_resident_kernel(x_ref, w_ref, b_ref, o_ref):
    """All S weight matrices VMEM-resident; step loop runs in-kernel."""
    num_steps = w_ref.shape[0]
    cdt = w_ref.dtype
    h0 = x_ref[...].astype(cdt)

    def body(s, h):
        return _ln_relu_step(h, w_ref[s], b_ref[s].astype(jnp.float32))

    h = lax.fori_loop(0, num_steps, body, h0, unroll=(num_steps <= 8))
    o_ref[...] = h.astype(o_ref.dtype)


def seqnn_streamed_kernel(x_ref, w_ref, b_ref, o_ref, h_ref):
    """Weights streamed KS steps at a time; carry in compute-dtype scratch."""
    ks = w_ref.shape[0]
    j = pl.program_id(1)

    @pl.when(j == 0)
    def _():
        h_ref[...] = x_ref[...].astype(h_ref.dtype)

    def body(s, h):
        return _ln_relu_step(h, w_ref[s], b_ref[s].astype(jnp.float32))

    h = lax.fori_loop(0, ks, body, h_ref[...], unroll=(ks <= 8))
    h_ref[...] = h

    @pl.when(j == pl.num_programs(1) - 1)
    def _():
        o_ref[...] = h.astype(o_ref.dtype)


# ----------------------------------------------------------------------------
# Planning helpers
# ----------------------------------------------------------------------------
def _round_up(x, m):
    return (x + m - 1) // m * m


def _vmem_budget_bytes():
    cap = 64 * 1024 * 1024                     # conservative fallback (v7x-sized)
    try:
        info = pltpu.get_tpu_info()
        cap = int(getattr(info, "vmem_capacity_bytes", cap))
    except Exception:
        pass
    # ~80% of physical leaves headroom for compiler-internal scratch:
    # ~51 MiB on v7x, ~102 MiB on v5e/v6e.
    return int(cap * 0.8)


_TILE_CANDIDATES = (1024, 512, 256, 128, 64, 32, 16, 8)


def _choose_plan(B, D, S, w_itemsize, x_itemsize, out_itemsize, budget):
    w_bytes = S * D * D * w_itemsize
    b_bytes = S * D * 4
    compute_itemsize = w_itemsize

    def io_bytes(tb):                          # double-buffered x / out tiles
        return 2 * tb * D * x_itemsize + 2 * tb * D * out_itemsize

    small_vmem = budget <= 80 * 1024 * 1024    # v7x-like (64 MiB, 2 TCs)
    b_ceiling = _round_up(max(B, 8), 8)

    # --- resident-weight plan: weights DMA'd from HBM once -------------------
    resident_fixed = 2 * (w_bytes + b_bytes)   # conservative (double-buffered)
    if resident_fixed <= int(0.6 * budget):
        want_two_tiles = B >= 256              # shard batch over v7x's 2 TCs
        for tb in _TILE_CANDIDATES:
            if tb > b_ceiling:
                continue
            if want_two_tiles and -(-B // tb) < 2:
                continue
            if resident_fixed + io_bytes(tb) <= int(0.9 * budget):
                return {"resident": True, "tb": tb, "ks": None}
        return {"resident": True, "tb": 8, "ks": None}

    # --- streamed plan: KS steps per grid iteration --------------------------
    ks = 1
    for cand in range(min(S, 16), 0, -1):
        if S % cand != 0:
            continue
        if 2 * cand * (D * D * w_itemsize + D * 4) <= int(0.4 * budget):
            ks = cand
            break
    w_stream = 2 * ks * (D * D * w_itemsize + D * 4)
    want_two_tiles = small_vmem and B >= 256
    for tb in _TILE_CANDIDATES:
        if tb > b_ceiling:
            continue
        if want_two_tiles and -(-B // tb) < 2:
            continue
        if (w_stream + io_bytes(tb) + tb * D * compute_itemsize
                <= int(0.9 * budget)):
            return {"resident": False, "tb": tb, "ks": ks}
    return {"resident": False, "tb": 8, "ks": ks}


# ----------------------------------------------------------------------------
# Forward wrapper
# ----------------------------------------------------------------------------
def seqnn_forward(x, weights_t, biases):
    """x: (B, D); weights_t: (S, D, D) as (in, out); biases: (S, 1, D) f32."""
    B, D = x.shape
    S = weights_t.shape[0]
    w_isz = jnp.dtype(weights_t.dtype).itemsize
    x_isz = jnp.dtype(x.dtype).itemsize
    out_dtype = x.dtype
    out_isz = x_isz

    budget = _vmem_budget_bytes()
    plan = _choose_plan(B, D, S, w_isz, x_isz, out_isz, budget)
    TB = plan["tb"]

    B_pad = _round_up(B, TB)
    x_p = x if B_pad == B else jnp.pad(x, ((0, B_pad - B), (0, 0)))
    nb = B_pad // TB

    if plan["resident"]:
        weight_fetches = 1
        grid_spec = pltpu.PrefetchScalarGridSpec(
            num_scalar_prefetch=0,
            grid=(nb,),
            in_specs=[
                pl.BlockSpec((TB, D), lambda i: (i, 0)),         # x tile
                pl.BlockSpec((S, D, D), lambda i: (0, 0, 0)),    # all weights (resident)
                pl.BlockSpec((S, 1, D), lambda i: (0, 0, 0)),    # all biases  (resident)
            ],
            out_specs=pl.BlockSpec((TB, D), lambda i: (i, 0)),
            scratch_shapes=[],
        )
        kernel = seqnn_resident_kernel
        dim_sem = ("parallel",)
    else:
        KS = plan["ks"]
        weight_fetches = nb
        grid_spec = pltpu.PrefetchScalarGridSpec(
            num_scalar_prefetch=0,
            grid=(nb, S // KS),
            in_specs=[
                pl.BlockSpec((TB, D), lambda i, j: (i, 0)),       # x tile
                pl.BlockSpec((KS, D, D), lambda i, j: (j, 0, 0)),  # KS step weights
                pl.BlockSpec((KS, 1, D), lambda i, j: (j, 0, 0)),  # KS step biases
            ],
            out_specs=pl.BlockSpec((TB, D), lambda i, j: (i, 0)),
            scratch_shapes=[pltpu.VMEM((TB, D), weights_t.dtype)],
        )
        kernel = seqnn_streamed_kernel
        dim_sem = ("parallel", "arbitrary")

    cost = pl.CostEstimate(
        flops=2 * S * B_pad * D * D,
        bytes_accessed=(x_p.size * x_isz
                        + B_pad * D * out_isz
                        + weight_fetches * (weights_t.size * w_isz
                                            + biases.size * 4)),
        transcendentals=S * B_pad,            # one rsqrt per row per step
    )

    out = pl.pallas_call(
        kernel,
        out_shape=jax.ShapeDtypeStruct((B_pad, D), out_dtype),
        grid_spec=grid_spec,
        compiler_params=pltpu.CompilerParams(
            dimension_semantics=dim_sem,
            vmem_limit_bytes=int(budget),
        ),
        cost_estimate=cost,
    )(x_p, weights_t, biases)

    return out if B_pad == B else out[:B]


# ----------------------------------------------------------------------------
# Reference + params
# ----------------------------------------------------------------------------
def seqnn_reference(x, weights_t, biases):
    """Pure-JAX reference matching the PyTorch forward (same compute dtype)."""
    cdt = weights_t.dtype
    h = x.astype(cdt)
    for s in range(weights_t.shape[0]):
        y = jnp.dot(h, weights_t[s], preferred_element_type=jnp.float32)
        y = y + biases[s].astype(jnp.float32)
        mu = jnp.mean(y, axis=-1, keepdims=True)
        yc = y - mu
        var = jnp.mean(yc * yc, axis=-1, keepdims=True)
        yn = yc * lax.rsqrt(var + _LN_EPS)
        h = jnp.maximum(yn, 0.0).astype(cdt)
    return h.astype(x.dtype)


def init_params(key, num_steps, dim):
    """Deterministic init mimicking nn.Linear default (uniform +/- 1/sqrt(in))."""
    bound = 1.0 / jnp.sqrt(dim)
    kw, kb = jax.random.split(key)
    # PyTorch weight is (out, in); build that, then transpose to (in, out).
    w_torch = jax.random.uniform(
        kw, (num_steps, dim, dim), jnp.float32, minval=-bound, maxval=bound)
    b = jax.random.uniform(
        kb, (num_steps, 1, dim), jnp.float32, minval=-bound, maxval=bound)
    w_t = jnp.transpose(w_torch, (0, 2, 1))   # (S, in, out)
    return w_t, b


if __name__ == "__main__":
    # Lane/sublane-friendly but small demo shapes: D multiple of 128, batch
    # large enough that the planner produces >= 2 batch tiles (v7x sharding).
    batch, dim, num_steps = 256, 128, 4

    key = jax.random.PRNGKey(0)
    kx, kp = jax.random.split(key)
    x = jax.random.normal(kx, (batch, dim), jnp.float32)
    w_f32, b = init_params(kp, num_steps, dim)

    fwd = jax.jit(seqnn_forward)

    # 1) f32-weight path: strict correctness check against the reference.
    out_f32 = jax.block_until_ready(fwd(x, w_f32, b))
    ref_f32 = seqnn_reference(x, w_f32, b)
    assert out_f32.shape == (batch, dim)
    assert jnp.allclose(out_f32, ref_f32, atol=1e-4, rtol=1e-4), \
        "f32 mismatch vs reference"

    # 2) bf16-weight path (MXU-friendly on v5e/v6e/v7x), f32 accumulation.
    w_bf16 = w_f32.astype(jnp.bfloat16)
    out_bf16 = jax.block_until_ready(fwd(x, w_bf16, b))
    ref_bf16 = seqnn_reference(x, w_bf16, b)
    assert jnp.allclose(out_bf16, ref_bf16, atol=2e-2, rtol=2e-2), \
        "bf16 mismatch vs reference"

    print("KERNEL_OK")
</pallas_src>

<mosaic_0001>
module attributes {stable_mosaic.version = 11 : i64} {
  func.func @seqnn_resident_kernel(%arg0: i32, %arg1: memref<128x128xf32, #tpu.memory_space<vmem>>, %arg2: memref<4x128x128xf32, #tpu.memory_space<vmem>>, %arg3: memref<4x1x128xf32, #tpu.memory_space<vmem>>, %arg4: memref<128x128xf32, #tpu.memory_space<vmem>>) attributes {dimension_semantics = [#tpu.dimension_semantics<parallel>], iteration_bounds = array<i64: 2>, scalar_prefetch = 0 : i64, scratch_operands = 0 : i64, tpu.core_type = #tpu.core_type<tc>, window_params = [{transform_indices = @transform_0, window_bounds = array<i64: 128, 128>}, {pipeline_mode = #tpu.pipeline_mode<synchronous>, transform_indices = @transform_1, window_bounds = array<i64: 4, 128, 128>}, {pipeline_mode = #tpu.pipeline_mode<synchronous>, transform_indices = @transform_2, window_bounds = array<i64: 4, 1, 128>}, {transform_indices = @transform_3, window_bounds = array<i64: 128, 128>}]} {
    %c0 = arith.constant 0 : index
    %c0_0 = arith.constant 0 : index
    %0 = vector.load %arg1[%c0, %c0_0] : memref<128x128xf32, #tpu.memory_space<vmem>>, vector<128x128xf32>
    %c0_i32 = arith.constant 0 : i32
    %1 = arith.index_cast %c0_i32 : i32 to index
    %c0_1 = arith.constant 0 : index
    %c0_2 = arith.constant 0 : index
    %2 = vector.load %arg2[%1, %c0_1, %c0_2] : memref<4x128x128xf32, #tpu.memory_space<vmem>>, vector<1x128x128xf32>
    %3 = vector.shape_cast %2 : vector<1x128x128xf32> to vector<128x128xf32>
    %4 = arith.index_cast %c0_i32 : i32 to index
    %c0_3 = arith.constant 0 : index
    %c0_4 = arith.constant 0 : index
    %5 = vector.load %arg3[%4, %c0_3, %c0_4] : memref<4x1x128xf32, #tpu.memory_space<vmem>>, vector<1x1x128xf32>
    %6 = vector.shape_cast %5 : vector<1x1x128xf32> to vector<1x128xf32>
    %cst = arith.constant dense<0.000000e+00> : vector<128x128xf32>
    %7 = tpu.matmul %0, %3, %cst {dimension_numbers = #tpu.dot_dimension_numbers<[1], [0], [0], [1], [0, 0, 1, 1], [], []>} : vector<128x128xf32>, vector<128x128xf32>, vector<128x128xf32> -> vector<128x128xf32>
    %8 = vector.broadcast %6 : vector<1x128xf32> to vector<128x128xf32>
    %9 = arith.addf %7, %8 : vector<128x128xf32>
    %cst_5 = arith.constant dense<0.000000e+00> : vector<128xf32>
    %10 = vector.multi_reduction <add>, %9, %cst_5 [1] : vector<128x128xf32> to vector<128xf32>
    %11 = vector.shape_cast %10 : vector<128xf32> to vector<128x1xf32>
    %cst_6 = arith.constant 1.280000e+02 : f32
    %12 = vector.broadcast %cst_6 : f32 to vector<128x1xf32>
    %13 = arith.divf %11, %12 : vector<128x1xf32>
    %14 = vector.broadcast %13 : vector<128x1xf32> to vector<128x128xf32>
    %15 = arith.subf %9, %14 : vector<128x128xf32>
    %16 = arith.mulf %15, %15 : vector<128x128xf32>
    %cst_7 = arith.constant dense<0.000000e+00> : vector<128xf32>
    %17 = vector.multi_reduction <add>, %16, %cst_7 [1] : vector<128x128xf32> to vector<128xf32>
    %18 = vector.shape_cast %17 : vector<128xf32> to vector<128x1xf32>
    %cst_8 = arith.constant 1.280000e+02 : f32
    %19 = vector.broadcast %cst_8 : f32 to vector<128x1xf32>
    %20 = arith.divf %18, %19 : vector<128x1xf32>
    %cst_9 = arith.constant 9.99999974E-6 : f32
    %21 = vector.broadcast %cst_9 : f32 to vector<128x1xf32>
    %22 = arith.addf %20, %21 : vector<128x1xf32>
    %23 = math.rsqrt %22 : vector<128x1xf32>
    %24 = vector.broadcast %23 : vector<128x1xf32> to vector<128x128xf32>
    %25 = arith.mulf %15, %24 : vector<128x128xf32>
    %cst_10 = arith.constant 0.000000e+00 : f32
    %26 = vector.broadcast %cst_10 : f32 to vector<128x128xf32>
    %27 = arith.maximumf %25, %26 : vector<128x128xf32>
    %c1_i32 = arith.constant 1 : i32
    %28 = arith.index_cast %c1_i32 : i32 to index
    %c0_11 = arith.constant 0 : index
    %c0_12 = arith.constant 0 : index
    %29 = vector.load %arg2[%28, %c0_11, %c0_12] : memref<4x128x128xf32, #tpu.memory_space<vmem>>, vector<1x128x128xf32>
    %30 = vector.shape_cast %29 : vector<1x128x128xf32> to vector<128x128xf32>
    %31 = arith.index_cast %c1_i32 : i32 to index
    %c0_13 = arith.constant 0 : index
    %c0_14 = arith.constant 0 : index
    %32 = vector.load %arg3[%31, %c0_13, %c0_14] : memref<4x1x128xf32, #tpu.memory_space<vmem>>, vector<1x1x128xf32>
    %33 = vector.shape_cast %32 : vector<1x1x128xf32> to vector<1x128xf32>
    %cst_15 = arith.constant dense<0.000000e+00> : vector<128x128xf32>
    %34 = tpu.matmul %27, %30, %cst_15 {dimension_numbers = #tpu.dot_dimension_numbers<[1], [0], [0], [1], [0, 0, 1, 1], [], []>} : vector<128x128xf32>, vector<128x128xf32>, vector<128x128xf32> -> vector<128x128xf32>
    %35 = vector.broadcast %33 : vector<1x128xf32> to vector<128x128xf32>
    %36 = arith.addf %34, %35 : vector<128x128xf32>
    %cst_16 = arith.constant dense<0.000000e+00> : vector<128xf32>
    %37 = vector.multi_reduction <add>, %36, %cst_16 [1] : vector<128x128xf32> to vector<128xf32>
    %38 = vector.shape_cast %37 : vector<128xf32> to vector<128x1xf32>
    %cst_17 = arith.constant 1.280000e+02 : f32
    %39 = vector.broadcast %cst_17 : f32 to vector<128x1xf32>
    %40 = arith.divf %38, %39 : vector<128x1xf32>
    %41 = vector.broadcast %40 : vector<128x1xf32> to vector<128x128xf32>
    %42 = arith.subf %36, %41 : vector<128x128xf32>
    %43 = arith.mulf %42, %42 : vector<128x128xf32>
    %cst_18 = arith.constant dense<0.000000e+00> : vector<128xf32>
    %44 = vector.multi_reduction <add>, %43, %cst_18 [1] : vector<128x128xf32> to vector<128xf32>
    %45 = vector.shape_cast %44 : vector<128xf32> to vector<128x1xf32>
    %cst_19 = arith.constant 1.280000e+02 : f32
    %46 = vector.broadcast %cst_19 : f32 to vector<128x1xf32>
    %47 = arith.divf %45, %46 : vector<128x1xf32>
    %cst_20 = arith.constant 9.99999974E-6 : f32
    %48 = vector.broadcast %cst_20 : f32 to vector<128x1xf32>
    %49 = arith.addf %47, %48 : vector<128x1xf32>
    %50 = math.rsqrt %49 : vector<128x1xf32>
    %51 = vector.broadcast %50 : vector<128x1xf32> to vector<128x128xf32>
    %52 = arith.mulf %42, %51 : vector<128x128xf32>
    %cst_21 = arith.constant 0.000000e+00 : f32
    %53 = vector.broadcast %cst_21 : f32 to vector<128x128xf32>
    %54 = arith.maximumf %52, %53 : vector<128x128xf32>
    %c2_i32 = arith.constant 2 : i32
    %55 = arith.index_cast %c2_i32 : i32 to index
    %c0_22 = arith.constant 0 : index
    %c0_23 = arith.constant 0 : index
    %56 = vector.load %arg2[%55, %c0_22, %c0_23] : memref<4x128x128xf32, #tpu.memory_space<vmem>>, vector<1x128x128xf32>
    %57 = vector.shape_cast %56 : vector<1x128x128xf32> to vector<128x128xf32>
    %58 = arith.index_cast %c2_i32 : i32 to index
    %c0_24 = arith.constant 0 : index
    %c0_25 = arith.constant 0 : index
    %59 = vector.load %arg3[%58, %c0_24, %c0_25] : memref<4x1x128xf32, #tpu.memory_space<vmem>>, vector<1x1x128xf32>
    %60 = vector.shape_cast %59 : vector<1x1x128xf32> to vector<1x128xf32>
    %cst_26 = arith.constant dense<0.000000e+00> : vector<128x128xf32>
    %61 = tpu.matmul %54, %57, %cst_26 {dimension_numbers = #tpu.dot_dimension_numbers<[1], [0], [0], [1], [0, 0, 1, 1], [], []>} : vector<128x128xf32>, vector<128x128xf32>, vector<128x128xf32> -> vector<128x128xf32>
    %62 = vector.broadcast %60 : vector<1x128xf32> to vector<128x128xf32>
    %63 = arith.addf %61, %62 : vector<128x128xf32>
    %cst_27 = arith.constant dense<0.000000e+00> : vector<128xf32>
    %64 = vector.multi_reduction <add>, %63, %cst_27 [1] : vector<128x128xf32> to vector<128xf32>
    %65 = vector.shape_cast %64 : vector<128xf32> to vector<128x1xf32>
    %cst_28 = arith.constant 1.280000e+02 : f32
    %66 = vector.broadcast %cst_28 : f32 to vector<128x1xf32>
    %67 = arith.divf %65, %66 : vector<128x1xf32>
    %68 = vector.broadcast %67 : vector<128x1xf32> to vector<128x128xf32>
    %69 = arith.subf %63, %68 : vector<128x128xf32>
    %70 = arith.mulf %69, %69 : vector<128x128xf32>
    %cst_29 = arith.constant dense<0.000000e+00> : vector<128xf32>
    %71 = vector.multi_reduction <add>, %70, %cst_29 [1] : vector<128x128xf32> to vector<128xf32>
    %72 = vector.shape_cast %71 : vector<128xf32> to vector<128x1xf32>
    %cst_30 = arith.constant 1.280000e+02 : f32
    %73 = vector.broadcast %cst_30 : f32 to vector<128x1xf32>
    %74 = arith.divf %72, %73 : vector<128x1xf32>
    %cst_31 = arith.constant 9.99999974E-6 : f32
    %75 = vector.broadcast %cst_31 : f32 to vector<128x1xf32>
    %76 = arith.addf %74, %75 : vector<128x1xf32>
    %77 = math.rsqrt %76 : vector<128x1xf32>
    %78 = vector.broadcast %77 : vector<128x1xf32> to vector<128x128xf32>
    %79 = arith.mulf %69, %78 : vector<128x128xf32>
    %cst_32 = arith.constant 0.000000e+00 : f32
    %80 = vector.broadcast %cst_32 : f32 to vector<128x128xf32>
    %81 = arith.maximumf %79, %80 : vector<128x128xf32>
    %c3_i32 = arith.constant 3 : i32
    %82 = arith.index_cast %c3_i32 : i32 to index
    %c0_33 = arith.constant 0 : index
    %c0_34 = arith.constant 0 : index
    %83 = vector.load %arg2[%82, %c0_33, %c0_34] : memref<4x128x128xf32, #tpu.memory_space<vmem>>, vector<1x128x128xf32>
    %84 = vector.shape_cast %83 : vector<1x128x128xf32> to vector<128x128xf32>
    %85 = arith.index_cast %c3_i32 : i32 to index
    %c0_35 = arith.constant 0 : index
    %c0_36 = arith.constant 0 : index
    %86 = vector.load %arg3[%85, %c0_35, %c0_36] : memref<4x1x128xf32, #tpu.memory_space<vmem>>, vector<1x1x128xf32>
    %87 = vector.shape_cast %86 : vector<1x1x128xf32> to vector<1x128xf32>
    %cst_37 = arith.constant dense<0.000000e+00> : vector<128x128xf32>
    %88 = tpu.matmul %81, %84, %cst_37 {dimension_numbers = #tpu.dot_dimension_numbers<[1], [0], [0], [1], [0, 0, 1, 1], [], []>} : vector<128x128xf32>, vector<128x128xf32>, vector<128x128xf32> -> vector<128x128xf32>
    %89 = vector.broadcast %87 : vector<1x128xf32> to vector<128x128xf32>
    %90 = arith.addf %88, %89 : vector<128x128xf32>
    %cst_38 = arith.constant dense<0.000000e+00> : vector<128xf32>
    %91 = vector.multi_reduction <add>, %90, %cst_38 [1] : vector<128x128xf32> to vector<128xf32>
    %92 = vector.shape_cast %91 : vector<128xf32> to vector<128x1xf32>
    %cst_39 = arith.constant 1.280000e+02 : f32
    %93 = vector.broadcast %cst_39 : f32 to vector<128x1xf32>
    %94 = arith.divf %92, %93 : vector<128x1xf32>
    %95 = vector.broadcast %94 : vector<128x1xf32> to vector<128x128xf32>
    %96 = arith.subf %90, %95 : vector<128x128xf32>
    %97 = arith.mulf %96, %96 : vector<128x128xf32>
    %cst_40 = arith.constant dense<0.000000e+00> : vector<128xf32>
    %98 = vector.multi_reduction <add>, %97, %cst_40 [1] : vector<128x128xf32> to vector<128xf32>
    %99 = vector.shape_cast %98 : vector<128xf32> to vector<128x1xf32>
    %cst_41 = arith.constant 1.280000e+02 : f32
    %100 = vector.broadcast %cst_41 : f32 to vector<128x1xf32>
    %101 = arith.divf %99, %100 : vector<128x1xf32>
    %cst_42 = arith.constant 9.99999974E-6 : f32
    %102 = vector.broadcast %cst_42 : f32 to vector<128x1xf32>
    %103 = arith.addf %101, %102 : vector<128x1xf32>
    %104 = math.rsqrt %103 : vector<128x1xf32>
    %105 = vector.broadcast %104 : vector<128x1xf32> to vector<128x128xf32>
    %106 = arith.mulf %96, %105 : vector<128x128xf32>
    %cst_43 = arith.constant 0.000000e+00 : f32
    %107 = vector.broadcast %cst_43 : f32 to vector<128x128xf32>
    %108 = arith.maximumf %106, %107 : vector<128x128xf32>
    %c4_i32 = arith.constant 4 : i32
    %c0_44 = arith.constant 0 : index
    %c0_45 = arith.constant 0 : index
    %109 = vector.load %arg4[%c0_44, %c0_45] : memref<128x128xf32, #tpu.memory_space<vmem>>, vector<128x128xf32>
    tpu.vector_store %arg4[%c0_44, %c0_45], %108 {strides = array<i32>} : memref<128x128xf32, #tpu.memory_space<vmem>>, vector<128x128xf32>,
    return
  }
  func.func @transform_0(%arg0: i32) -> (i32, i32) {
    %c0_i32 = arith.constant 0 : i32
    %c0_i32_0 = arith.constant 0 : i32
    return %arg0, %c0_i32 : i32, i32
  }
  func.func @transform_1(%arg0: i32) -> (i32, i32, i32) {
    %c0_i32 = arith.constant 0 : i32
    %c0_i32_0 = arith.constant 0 : i32
    %c0_i32_1 = arith.constant 0 : i32
    %c0_i32_2 = arith.constant 0 : i32
    return %c0_i32, %c0_i32_0, %c0_i32_1 : i32, i32, i32
  }
  func.func @transform_2(%arg0: i32) -> (i32, i32, i32) {
    %c0_i32 = arith.constant 0 : i32
    %c0_i32_0 = arith.constant 0 : i32
    %c0_i32_1 = arith.constant 0 : i32
    %c0_i32_2 = arith.constant 0 : i32
    return %c0_i32, %c0_i32_0, %c0_i32_1 : i32, i32, i32
  }
  func.func @transform_3(%arg0: i32) -> (i32, i32) {
    %c0_i32 = arith.constant 0 : i32
    %c0_i32_0 = arith.constant 0 : i32
    return %arg0, %c0_i32 : i32, i32
  }
}

</mosaic_0001>

<llo_original>
// kernel: seqnn_forward.1
$region0: #{seqnn_forward.1}
  #allocation0 [shape = 'u32[]', space=smem, size = 0x4, offset = 0x4, fixed_abs, tag = 'smem constant byte address 0x4 - core index']
  #allocation1 [shape = 'u32[144,128]{1,0:T(1,128)}', space=vmem, size = 0x12000, scoped, tag = 'internal scratch']
  %s0 = inlined_call_operand.hbm [shape: f32[256,128], index: 0, kind: input, shape index: {}]
  %s1 = inlined_call_operand.hbm [shape: f32[4,128,128], index: 1, kind: input, shape index: {}]
  %s2 = inlined_call_operand.vmem [shape: f32[4,1,128], index: 2, kind: input, shape index: {}]
  %s3 = inlined_call_operand.hbm [shape: f32[256,128], index: 3, kind: output, shape index: {}]
  %s4 = sld [smem:[#allocation0]]
  $region53: #{seqnn_forward.1} parent=0
    _
  %s6 = ssub.s32 1, %s4
  %s7 = scalar_select 0, %s6, %s4
  $region1: #{seqnn_forward.1} parent=0
    #allocation2 [shape = 'u8[131072]{0}', space=vmem, size = 0x20000, scoped, tag = 'input window, operand 0']
    #allocation3 [shape = 's32[2]{0}', space=sflag, size = 0x8, scoped, tag = 'scoped memory for seqnn_forward.1']
    #allocation4 [shape = 's32[2]{0}', space=sflag, size = 0x8, scoped, tag = 'scoped memory for seqnn_forward.1']
    #allocation5 [shape = 'u8[262144]{0}', space=vmem, size = 0x40000, scoped, tag = 'input window, operand 1, single buffered']
    #allocation6 [shape = 's32[1]{0}', space=sflag, size = 0x4, scoped, tag = 'scoped memory for seqnn_forward.1']
    #allocation7 [shape = 'u8[131072]{0}', space=vmem, size = 0x20000, scoped, tag = 'output window, operand 0']
    %8 = vsyncpa [#allocation3], 0
    %s9 = scalar_lea.sflag [#allocation3], 1
    %10 = vsyncpa %s9, 0
    %11 = vsyncpa [#allocation6], 0
    %12 = vsyncpa [#allocation4], 0
    %s13 = scalar_lea.sflag [#allocation4], 1
    %14 = vsyncpa %s13, 0
    loop: start=0, step=1, limit=4
    $region2: #{seqnn_forward.1} parent=1 // loop_pre_header
      _
    $region3: #{seqnn_forward.1} parent=1 // loop_header
      %s16 = sphi 0, %s20
      %p17 = scmp.ge.s32.totalorder %s16, 4
      %s26 = sphi 0, %s28
      %s29 = sphi 0, %s26
      %s30 = sphi 0, %s29
      %s46 = sphi 0, %s30
      %s50 = sphi 0, %s50
      %s52 = sphi 0, %s50
      %s53 = sphi 0, %s52
      %s67 = sphi 0, %s53
      %s71 = sphi 0, %s71
      %s73 = sphi 0, %s71
      %s74 = sphi 0, %s73
      %s88 = sphi 0, %s74
      %s94 = sphi 0, %s96
      %s97 = sphi 0, %s94
      %s98 = sphi 0, %s97
      %s114 = sphi 0, %s98
    $region4: #{seqnn_forward.1} parent=1 // loop_header_branch
      %19 = sbr.rel (%p17) target = $region8
    $region5: #{seqnn_forward.1} parent=1 // loop_body
      %s21 = ssub.s32 %s16, 1
      %s22 = ssub.s32 %s16, 2
      %s23 = sadd.s32 %s16, 1
      %s24 = ssub.s32 %s16, %s23
      %p25 = scmp.eq.s32.totalorder %s24, 0
      %s27 = sadd.s32 %s26, 1
      %s28 = scalar_select %p25, %s26, %s27
      %p31 = pneg %p25
      %p32 = scmp.eq.s32.totalorder %s16, 1
      %p33 = por %p31, %p32
      %p34 = scmp.ne.s32.totalorder %s26, %s29
      %p35 = scmp.eq.s32.totalorder %s16, 0
      %p36 = por %p34, %p35
      %p37 = scmp.ne.s32.totalorder %s26, %s29
      %p38 = scmp.eq.s32.totalorder %s21, 1
      %p39 = por %p37, %p38
      %p40 = scmp.ne.s32.totalorder %s29, %s30
      %p41 = scmp.eq.s32.totalorder %s21, 0
      %p42 = por %p40, %p41
      %p43 = scmp.ne.s32.totalorder %s29, %s30
      %p44 = scmp.eq.s32.totalorder %s22, 1
      %p45 = por %p43, %p44
      %p47 = scmp.ne.s32.totalorder %s30, %s46
      %p48 = scmp.eq.s32.totalorder %s22, 0
      %p49 = por %p47, %p48
      %s51 = sadd.s32 %s50, 1
      %p54 = scmp.eq.s32.totalorder %s16, 1
      %p55 = scmp.ne.s32.totalorder %s50, %s52
      %p56 = scmp.eq.s32.totalorder %s16, 0
      %p57 = por %p55, %p56
      %p58 = scmp.ne.s32.totalorder %s50, %s52
      %p59 = scmp.eq.s32.totalorder %s21, 1
      %p60 = por %p58, %p59
      %p61 = scmp.ne.s32.totalorder %s52, %s53
      %p62 = scmp.eq.s32.totalorder %s21, 0
      %p63 = por %p61, %p62
      %p64 = scmp.ne.s32.totalorder %s52, %s53
      %p65 = scmp.eq.s32.totalorder %s22, 1
      %p66 = por %p64, %p65
      %p68 = scmp.ne.s32.totalorder %s53, %s67
      %p69 = scmp.eq.s32.totalorder %s22, 0
      %p70 = por %p68, %p69
      %s72 = sadd.s32 %s71, 1
      %p75 = scmp.eq.s32.totalorder %s16, 1
      %p76 = scmp.ne.s32.totalorder %s71, %s73
      %p77 = scmp.eq.s32.totalorder %s16, 0
      %p78 = por %p76, %p77
      %p79 = scmp.ne.s32.totalorder %s71, %s73
      %p80 = scmp.eq.s32.totalorder %s21, 1
      %p81 = por %p79, %p80
      %p82 = scmp.ne.s32.totalorder %s73, %s74
      %p83 = scmp.eq.s32.totalorder %s21, 0
      %p84 = por %p82, %p83
      %p85 = scmp.ne.s32.totalorder %s73, %s74
      %p86 = scmp.eq.s32.totalorder %s22, 1
      %p87 = por %p85, %p86
      %p89 = scmp.ne.s32.totalorder %s74, %s88
      %p90 = scmp.eq.s32.totalorder %s22, 0
      %p91 = por %p89, %p90
      %s92 = ssub.s32 %s16, %s23
      %p93 = scmp.eq.s32.totalorder %s92, 0
      %s95 = sadd.s32 %s94, 1
      %s96 = scalar_select %p93, %s94, %s95
      %p99 = pneg %p93
      %p100 = scmp.eq.s32.totalorder %s16, 1
      %p101 = por %p99, %p100
      %p102 = scmp.ne.s32.totalorder %s94, %s97
      %p103 = scmp.eq.s32.totalorder %s16, 0
      %p104 = por %p102, %p103
      %p105 = scmp.ne.s32.totalorder %s94, %s97
      %p106 = scmp.eq.s32.totalorder %s21, 1
      %p107 = por %p105, %p106
      %p108 = scmp.ne.s32.totalorder %s97, %s98
      %p109 = scmp.eq.s32.totalorder %s21, 0
      %p110 = por %p108, %p109
      %p111 = scmp.ne.s32.totalorder %s97, %s98
      %p112 = scmp.eq.s32.totalorder %s22, 1
      %p113 = por %p111, %p112
      %p115 = scmp.ne.s32.totalorder %s98, %s114
      %p116 = scmp.eq.s32.totalorder %s22, 0
      %p117 = por %p115, %p116
      %p118 = scmp.le.s32.totalorder 1, %s16
      %p119 = scmp.lt.s32.totalorder %s16, 3
      %p120 = pnand %p118, %p119
      %p121 = pneg %p120
      // Predicated region
      $region9: #{seqnn_forward.1} parent=5 // pred_check
        _
      $region10: #{seqnn_forward.1} parent=5 // pred_check_branch
        %123 = sbr.rel (%p120) target = $region12
      $region11: #{seqnn_forward.1} parent=5 // pred_region
        %s124 = ssub.s32 %s16, 1
        // Predicated region
        $region13: #{seqnn_forward.1} parent=11 // pred_check
          %p125 = pneg %p63
        $region14: #{seqnn_forward.1} parent=11 // pred_check_branch
          %127 = sbr.rel (%p125) target = $region16
        $region15: #{seqnn_forward.1} parent=11 // pred_region
          %s129 = ssub.s32 8192, 8192
          %130 = vsyncadd [#allocation6], %s129
          %s131 = sshll.u32 [#allocation5], 4
          %s132 = int_to_ptr.vmem [resolvable:$true] %s131
          %137 = dma.hbm_to_vmem [thread:$0]  %s1, 8192, %s132, [#allocation6], 128, 128, 8
        $region16: #{seqnn_forward.1} parent=11 // pred_fallthru
          _
        // Predicated region
        $region17: #{seqnn_forward.1} parent=11 // pred_check
          %p138 = pneg %p84
        $region18: #{seqnn_forward.1} parent=11 // pred_check_branch
          %140 = sbr.rel (%p138) target = $region20
        $region19: #{seqnn_forward.1} parent=11 // pred_region
          _
        $region20: #{seqnn_forward.1} parent=11 // pred_fallthru
          _
      $region12: #{seqnn_forward.1} parent=5 // pred_fallthru
        _
      %p141 = scmp.lt.s32.totalorder %s16, 2
      // Predicated region
      $region21: #{seqnn_forward.1} parent=5 // pred_check
        %p142 = pneg %p141
      $region22: #{seqnn_forward.1} parent=5 // pred_check_branch
        %144 = sbr.rel (%p142) target = $region24
      $region23: #{seqnn_forward.1} parent=5 // pred_region
        // Predicated region
        $region25: #{seqnn_forward.1} parent=23 // pred_check
          %p145 = pneg %p36
        $region26: #{seqnn_forward.1} parent=23 // pred_check_branch
          %147 = sbr.rel (%p145) target = $region28
        $region27: #{seqnn_forward.1} parent=23 // pred_region
          %s148 = sand.u32 %s26, 1
          %s149 = scalar_lea.sflag [#allocation3], %s148
          %s150 = sand.u32 %s26, 1
          %s151 = smul.addr %s150, 128
          %s152 = scalar_lea.vmem [#allocation2], %s151
          %s153 = smul.u32 16, %s16
          %s155 = ssub.s32 2048, 2048
          %156 = vsyncadd %s149, %s155
          %s157 = smul.addr %s153, 128
          %s158 = scalar_lea.hbm %s0, %s157
          %s159 = sshll.u32 %s152, 4
          %s160 = int_to_ptr.vmem [resolvable:$true] %s159
          %165 = dma.hbm_to_vmem [thread:$0]  %s158, 2048, %s160, %s149, 128, 128, 8
        $region28: #{seqnn_forward.1} parent=23 // pred_fallthru
          _
      $region24: #{seqnn_forward.1} parent=5 // pred_fallthru
        _
      %p166 = scmp.le.s32.totalorder 1, %s16
      %p167 = scmp.lt.s32.totalorder %s16, 3
      %p168 = pnand %p166, %p167
      %p169 = pneg %p168
      // Predicated region
      $region29: #{seqnn_forward.1} parent=5 // pred_check
        _
      $region30: #{seqnn_forward.1} parent=5 // pred_check_branch
        %171 = sbr.rel (%p168) target = $region32
      $region31: #{seqnn_forward.1} parent=5 // pred_region
        %s172 = ssub.s32 %s16, 1
        %s173 = sand.u32 %s29, 1
        %s174 = scalar_lea.sflag [#allocation3], %s173
        %s175 = sand.u32 %s29, 1
        %s176 = smul.addr %s175, 128
        %s177 = scalar_lea.vmem [#allocation2], %s176
        // Predicated region
        $region33: #{seqnn_forward.1} parent=31 // pred_check
          %p178 = pneg %p42
        $region34: #{seqnn_forward.1} parent=31 // pred_check_branch
          %180 = sbr.rel (%p178) target = $region36
        $region35: #{seqnn_forward.1} parent=31 // pred_region
          %181 = dma.done %s174, 2048
        $region36: #{seqnn_forward.1} parent=31 // pred_fallthru
          _
        // Predicated region
        $region37: #{seqnn_forward.1} parent=31 // pred_check
          %p182 = pneg %p63
        $region38: #{seqnn_forward.1} parent=31 // pred_check_branch
          %184 = sbr.rel (%p182) target = $region40
        $region39: #{seqnn_forward.1} parent=31 // pred_region
          %185 = dma.done [#allocation6], 8192
        $region40: #{seqnn_forward.1} parent=31 // pred_fallthru
          _
        %s186 = sand.u32 %s29, 1
        %s187 = scalar_lea.sflag [#allocation3], %s186
        %s188 = sand.u32 %s29, 1
        %s189 = smul.addr %s188, 128
        %s190 = scalar_lea.vmem [#allocation2], %s189
        %p191 = pneg %p42
        %p192 = pneg %p39
        %p193 = pneg %p63
        %p194 = pneg %p60
        %p195 = pneg %p84
        %p196 = pneg %p81
        %p197 = pneg %p110
        %p198 = pneg %p107
        %s199 = sand.u32 %s97, 1
        %s200 = scalar_lea.sflag [#allocation4], %s199
        %s201 = sand.u32 %s97, 1
        %s202 = smul.addr %s201, 128
        %s203 = scalar_lea.vmem [#allocation7], %s202
        %s204 = smul.u32 16, %s21
        %s205 = smul.u32 16, %s21
        %v206 = vld [vmem:[%s177] sm:$0xff]
        %v207 = vld [vmem:[%s177 + $0x8] sm:$0xff]
        %v208 = vld [vmem:[%s177 + $0x10] sm:$0xff]
        %v209 = vld [vmem:[%s177 + $0x18] sm:$0xff]
        %v210 = vld [vmem:[%s177 + $0x20] sm:$0xff]
        %v211 = vld [vmem:[%s177 + $0x28] sm:$0xff]
        %v212 = vld [vmem:[%s177 + $0x30] sm:$0xff]
        %v213 = vld [vmem:[%s177 + $0x38] sm:$0xff]
        %v214 = vld [vmem:[%s177 + $0x40] sm:$0xff]
        %v215 = vld [vmem:[%s177 + $0x48] sm:$0xff]
        %v216 = vld [vmem:[%s177 + $0x50] sm:$0xff]
        %v217 = vld [vmem:[%s177 + $0x58] sm:$0xff]
        %v218 = vld [vmem:[%s177 + $0x60] sm:$0xff]
        %v219 = vld [vmem:[%s177 + $0x68] sm:$0xff]
        %v220 = vld [vmem:[%s177 + $0x70] sm:$0xff]
        %v221 = vld [vmem:[%s177 + $0x78] sm:$0xff]
        %v222 = vld [vmem:[#allocation5] sm:$0xff]
        %v223 = vld [vmem:[#allocation5 + $0x8] sm:$0xff]
        %v224 = vld [vmem:[#allocation5 + $0x10] sm:$0xff]
        %v225 = vld [vmem:[#allocation5 + $0x18] sm:$0xff]
        %v226 = vld [vmem:[#allocation5 + $0x20] sm:$0xff]
        %v227 = vld [vmem:[#allocation5 + $0x28] sm:$0xff]
        %v228 = vld [vmem:[#allocation5 + $0x30] sm:$0xff]
        %v229 = vld [vmem:[#allocation5 + $0x38] sm:$0xff]
        %v230 = vld [vmem:[#allocation5 + $0x40] sm:$0xff]
        %v231 = vld [vmem:[#allocation5 + $0x48] sm:$0xff]
        %v232 = vld [vmem:[#allocation5 + $0x50] sm:$0xff]
        %v233 = vld [vmem:[#allocation5 + $0x58] sm:$0xff]
        %v234 = vld [vmem:[#allocation5 + $0x60] sm:$0xff]
        %v235 = vld [vmem:[#allocation5 + $0x68] sm:$0xff]
        %v236 = vld [vmem:[#allocation5 + $0x70] sm:$0xff]
        %v237 = vld [vmem:[#allocation5 + $0x78] sm:$0xff]
        %v238 = vld [vmem:[%s2] sm:$0x1]
        %v240 = vlaneseq
        %v241 = vshrl.u32 %v240, 7
        %v242 = vsub.s32 0, %v241
        %v243 = vrot.slane %v238, %v242
        %245 = vmatprep.subr.mxu0 0.0
        %246 = vmatpush1.msra.mxu0 %v222
        %247 = vmatprep.subr.mxu0 0.0
        %248 = vmatpush1.msra.mxu0 %v223
        %249 = vmatprep.subr.mxu0 0.0
        %250 = vmatpush1.msra.mxu0 %v224
        %251 = vmatprep.subr.mxu0 0.0
        %252 = vmatpush1.msra.mxu0 %v225
        %253 = vmatprep.subr.mxu0 0.0
        %254 = vmatpush1.msra.mxu0 %v226
        %255 = vmatprep.subr.mxu0 0.0
        %256 = vmatpush1.msra.mxu0 %v227
        %257 = vmatprep.subr.mxu0 0.0
        %258 = vmatpush1.msra.mxu0 %v228
        %259 = vmatprep.subr.mxu0 0.0
        %260 = vmatpush1.msra.mxu0 %v229
        %261 = vmatprep.subr.mxu0 0.0
        %262 = vmatpush1.msra.mxu0 %v230
        %263 = vmatprep.subr.mxu0 0.0
        %264 = vmatpush1.msra.mxu0 %v231
        %265 = vmatprep.subr.mxu0 0.0
        %266 = vmatpush1.msra.mxu0 %v232
        %267 = vmatprep.subr.mxu0 0.0
        %268 = vmatpush1.msra.mxu0 %v233
        %269 = vmatprep.subr.mxu0 0.0
        %270 = vmatpush1.msra.mxu0 %v234
        %271 = vmatprep.subr.mxu0 0.0
        %272 = vmatpush1.msra.mxu0 %v235
        %273 = vmatprep.subr.mxu0 0.0
        %274 = vmatpush1.msra.mxu0 %v236
        %275 = vmatprep.subr.mxu0 0.0
        %276 = vmatpush1.msra.mxu0 %v237
        %277 = vmatprep.subr.mxu0 0.0
        %278 = vmatpush1.msra.mxu0 0.0
        %279 = vmatprep.subr.mxu0 0.0
        %280 = vmatpush1.msra.mxu0 0.0
        %281 = vmatprep.subr.mxu0 0.0
        %282 = vmatpush1.msra.mxu0 0.0
        %283 = vmatprep.subr.mxu0 0.0
        %284 = vmatpush1.msra.mxu0 0.0
        %285 = vmatprep.subr.mxu0 0.0
        %286 = vmatpush1.msra.mxu0 0.0
        %287 = vmatprep.subr.mxu0 0.0
        %288 = vmatpush1.msra.mxu0 0.0
        %289 = vmatprep.subr.mxu0 0.0
        %290 = vmatpush1.msra.mxu0 0.0
        %291 = vmatprep.subr.mxu0 0.0
        %292 = vmatpush1.msra.mxu0 0.0
        %293 = vmatprep.subr.mxu0 0.0
        %294 = vmatpush1.msra.mxu0 0.0
        %295 = vmatprep.subr.mxu0 0.0
        %296 = vmatpush1.msra.mxu0 0.0
        %297 = vmatprep.subr.mxu0 0.0
        %298 = vmatpush1.msra.mxu0 0.0
        %299 = vmatprep.subr.mxu0 0.0
        %300 = vmatpush1.msra.mxu0 0.0
        %301 = vmatprep.subr.mxu0 0.0
        %302 = vmatpush1.msra.mxu0 0.0
        %303 = vmatprep.subr.mxu0 0.0
        %304 = vmatpush1.msra.mxu0 0.0
        %305 = vmatprep.subr.mxu0 0.0
        %306 = vmatpush1.msra.mxu0 0.0
        %307 = vmatprep.subr.mxu0 0.0
        %308 = vmatpush1.msra.mxu0 0.0
        %309 = vmatprep.mubr.f32.mxu0 0.0
        %310 = vmatmul.mubr.f32.gmra.mrb[0].mxu0 %v206
        %v311 = vpop.f32.mrb[0].mxu0
        %v312 = vadd.f32 %v243, %v311
        %v313 = vpop.f32.mrb[0].mxu0
        %314 = vmatprep.mubr.f32.mxu0 0.0
        %315 = vmatmul.mubr.f32.gmra.mrb[0].mxu0 %v207
        %v316 = vpop.f32.mrb[0].mxu0
        %v317 = vadd.f32 %v243, %v316
        %v318 = vpop.f32.mrb[0].mxu0
        %319 = vmatprep.mubr.f32.mxu0 0.0
        %320 = vmatmul.mubr.f32.gmra.mrb[0].mxu0 %v208
        %v321 = vpop.f32.mrb[0].mxu0
        %v322 = vadd.f32 %v243, %v321
        %v323 = vpop.f32.mrb[0].mxu0
        %324 = vmatprep.mubr.f32.mxu0 0.0
        %325 = vmatmul.mubr.f32.gmra.mrb[0].mxu0 %v209
        %v326 = vpop.f32.mrb[0].mxu0
        %v327 = vadd.f32 %v243, %v326
        %v328 = vpop.f32.mrb[0].mxu0
        %329 = vmatprep.mubr.f32.mxu0 0.0
        %330 = vmatmul.mubr.f32.gmra.mrb[0].mxu0 %v210
        %v331 = vpop.f32.mrb[0].mxu0
        %v332 = vadd.f32 %v243, %v331
        %v333 = vpop.f32.mrb[0].mxu0
        %334 = vmatprep.mubr.f32.mxu0 0.0
        %335 = vmatmul.mubr.f32.gmra.mrb[0].mxu0 %v211
        %v336 = vpop.f32.mrb[0].mxu0
        %v337 = vadd.f32 %v243, %v336
        %v338 = vpop.f32.mrb[0].mxu0
        %339 = vmatprep.mubr.f32.mxu0 0.0
        %340 = vmatmul.mubr.f32.gmra.mrb[0].mxu0 %v212
        %v341 = vpop.f32.mrb[0].mxu0
        %v342 = vadd.f32 %v243, %v341
        %v343 = vpop.f32.mrb[0].mxu0
        %344 = vmatprep.mubr.f32.mxu0 0.0
        %345 = vmatmul.mubr.f32.gmra.mrb[0].mxu0 %v213
        %v346 = vpop.f32.mrb[0].mxu0
        %v347 = vadd.f32 %v243, %v346
        %v348 = vpop.f32.mrb[0].mxu0
        %349 = vmatprep.mubr.f32.mxu0 0.0
        %350 = vmatmul.mubr.f32.gmra.mrb[0].mxu0 %v214
        %v351 = vpop.f32.mrb[0].mxu0
        %v352 = vadd.f32 %v243, %v351
        %v353 = vpop.f32.mrb[0].mxu0
        %354 = vmatprep.mubr.f32.mxu0 0.0
        %355 = vmatmul.mubr.f32.gmra.mrb[0].mxu0 %v215
        %v356 = vpop.f32.mrb[0].mxu0
        %v357 = vadd.f32 %v243, %v356
        %v358 = vpop.f32.mrb[0].mxu0
        %359 = vmatprep.mubr.f32.mxu0 0.0
        %360 = vmatmul.mubr.f32.gmra.mrb[0].mxu0 %v216
        %v361 = vpop.f32.mrb[0].mxu0
        %v362 = vadd.f32 %v243, %v361
        %v363 = vpop.f32.mrb[0].mxu0
        %364 = vmatprep.mubr.f32.mxu0 0.0
        %365 = vmatmul.mubr.f32.gmra.mrb[0].mxu0 %v217
        %v366 = vpop.f32.mrb[0].mxu0
        %v367 = vadd.f32 %v243, %v366
        %v368 = vpop.f32.mrb[0].mxu0
        %369 = vmatprep.mubr.f32.mxu0 0.0
        %370 = vmatmul.mubr.f32.gmra.mrb[0].mxu0 %v218
        %v371 = vpop.f32.mrb[0].mxu0
        %v372 = vadd.f32 %v243, %v371
        %v373 = vpop.f32.mrb[0].mxu0
        %374 = vmatprep.mubr.f32.mxu0 0.0
        %375 = vmatmul.mubr.f32.gmra.mrb[0].mxu0 %v219
        %v376 = vpop.f32.mrb[0].mxu0
        %v377 = vadd.f32 %v243, %v376
        %v378 = vpop.f32.mrb[0].mxu0
        %379 = vmatprep.mubr.f32.mxu0 0.0
        %380 = vmatmul.mubr.f32.gmra.mrb[0].mxu0 %v220
        %v381 = vpop.f32.mrb[0].mxu0
        %v382 = vadd.f32 %v243, %v381
        %v383 = vpop.f32.mrb[0].mxu0
        %384 = vmatprep.mubr.f32.mxu0 0.0
        %385 = vmatmul.mubr.f32.gmra.mrb[0].mxu0 %v221
        %v386 = vpop.f32.mrb[0].mxu0
        %v387 = vadd.f32 %v243, %v386
        %v388 = vpop.f32.mrb[0].mxu0
        %389 = vdwg.mxu0
        %390 = vadd.xlane.f32.xlu0 %v312
        %v391 = vpop.xlane.xlu0 %390
        %392 = vadd.xlane.f32.xlu0 %v317
        %v393 = vpop.xlane.xlu0 %392
        %394 = vadd.xlane.f32.xlu0 %v322
        %v395 = vpop.xlane.xlu0 %394
        %396 = vadd.xlane.f32.xlu0 %v327
        %v397 = vpop.xlane.xlu0 %396
        %398 = vadd.xlane.f32.xlu0 %v332
        %v399 = vpop.xlane.xlu0 %398
        %400 = vadd.xlane.f32.xlu0 %v337
        %v401 = vpop.xlane.xlu0 %400
        %402 = vadd.xlane.f32.xlu0 %v342
        %v403 = vpop.xlane.xlu0 %402
        %404 = vadd.xlane.f32.xlu0 %v347
        %v405 = vpop.xlane.xlu0 %404
        %406 = vadd.xlane.f32.xlu0 %v352
        %v407 = vpop.xlane.xlu0 %406
        %408 = vadd.xlane.f32.xlu0 %v357
        %v409 = vpop.xlane.xlu0 %408
        %410 = vadd.xlane.f32.xlu0 %v362
        %v411 = vpop.xlane.xlu0 %410
        %412 = vadd.xlane.f32.xlu0 %v367
        %v413 = vpop.xlane.xlu0 %412
        %414 = vadd.xlane.f32.xlu0 %v372
        %v415 = vpop.xlane.xlu0 %414
        %416 = vadd.xlane.f32.xlu0 %v377
        %v417 = vpop.xlane.xlu0 %416
        %418 = vadd.xlane.f32.xlu0 %v382
        %v419 = vpop.xlane.xlu0 %418
        %420 = vadd.xlane.f32.xlu0 %v387
        %v421 = vpop.xlane.xlu0 %420
        %v422 = vrcp.pop 128.0
        %v423 = vmul.f32 %v391, %v422
        %v424 = vmul.f32 %v393, %v422
        %v425 = vmul.f32 %v395, %v422
        %v426 = vmul.f32 %v397, %v422
        %v427 = vmul.f32 %v399, %v422
        %v428 = vmul.f32 %v401, %v422
        %v429 = vmul.f32 %v403, %v422
        %v430 = vmul.f32 %v405, %v422
        %v431 = vmul.f32 %v407, %v422
        %v432 = vmul.f32 %v409, %v422
        %v433 = vmul.f32 %v411, %v422
        %v434 = vmul.f32 %v413, %v422
        %v435 = vmul.f32 %v415, %v422
        %v436 = vmul.f32 %v417, %v422
        %v437 = vmul.f32 %v419, %v422
        %v438 = vmul.f32 %v421, %v422
        %v439 = vsub.f32 %v312, %v423
        %v440 = vsub.f32 %v317, %v424
        %v441 = vsub.f32 %v322, %v425
        %v442 = vsub.f32 %v327, %v426
        %v443 = vsub.f32 %v332, %v427
        %v444 = vsub.f32 %v337, %v428
        %v445 = vsub.f32 %v342, %v429
        %v446 = vsub.f32 %v347, %v430
        %v447 = vsub.f32 %v352, %v431
        %v448 = vsub.f32 %v357, %v432
        %v449 = vsub.f32 %v362, %v433
        %v450 = vsub.f32 %v367, %v434
        %v451 = vsub.f32 %v372, %v435
        %v452 = vsub.f32 %v377, %v436
        %v453 = vsub.f32 %v382, %v437
        %v454 = vsub.f32 %v387, %v438
        %v455 = vmul.f32 %v439, %v439
        %v456 = vmul.f32 %v440, %v440
        %v457 = vmul.f32 %v441, %v441
        %v458 = vmul.f32 %v442, %v442
        %v459 = vmul.f32 %v443, %v443
        %v460 = vmul.f32 %v444, %v444
        %v461 = vmul.f32 %v445, %v445
        %v462 = vmul.f32 %v446, %v446
        %v463 = vmul.f32 %v447, %v447
        %v464 = vmul.f32 %v448, %v448
        %v465 = vmul.f32 %v449, %v449
        %v466 = vmul.f32 %v450, %v450
        %v467 = vmul.f32 %v451, %v451
        %v468 = vmul.f32 %v452, %v452
        %v469 = vmul.f32 %v453, %v453
        %v470 = vmul.f32 %v454, %v454
        %471 = vadd.xlane.f32.xlu0 %v455
        %v472 = vpop.xlane.xlu0 %471
        %473 = vadd.xlane.f32.xlu0 %v456
        %v474 = vpop.xlane.xlu0 %473
        %475 = vadd.xlane.f32.xlu0 %v457
        %v476 = vpop.xlane.xlu0 %475
        %477 = vadd.xlane.f32.xlu0 %v458
        %v478 = vpop.xlane.xlu0 %477
        %479 = vadd.xlane.f32.xlu0 %v459
        %v480 = vpop.xlane.xlu0 %479
        %481 = vadd.xlane.f32.xlu0 %v460
        %v482 = vpop.xlane.xlu0 %481
        %483 = vadd.xlane.f32.xlu0 %v461
        %v484 = vpop.xlane.xlu0 %483
        %485 = vadd.xlane.f32.xlu0 %v462
        %v486 = vpop.xlane.xlu0 %485
        %487 = vadd.xlane.f32.xlu0 %v463
        %v488 = vpop.xlane.xlu0 %487
        %489 = vadd.xlane.f32.xlu0 %v464
        %v490 = vpop.xlane.xlu0 %489
        %491 = vadd.xlane.f32.xlu0 %v465
        %v492 = vpop.xlane.xlu0 %491
        %493 = vadd.xlane.f32.xlu0 %v466
        %v494 = vpop.xlane.xlu0 %493
        %495 = vadd.xlane.f32.xlu0 %v467
        %v496 = vpop.xlane.xlu0 %495
        %497 = vadd.xlane.f32.xlu0 %v468
        %v498 = vpop.xlane.xlu0 %497
        %499 = vadd.xlane.f32.xlu0 %v469
        %v500 = vpop.xlane.xlu0 %499
        %501 = vadd.xlane.f32.xlu0 %v470
        %v502 = vpop.xlane.xlu0 %501
        %v503 = vmul.f32 %v472, %v422
        %v504 = vmul.f32 %v474, %v422
        %v505 = vmul.f32 %v476, %v422
        %v506 = vmul.f32 %v478, %v422
        %v507 = vmul.f32 %v480, %v422
        %v508 = vmul.f32 %v482, %v422
        %v509 = vmul.f32 %v484, %v422
        %v510 = vmul.f32 %v486, %v422
        %v511 = vmul.f32 %v488, %v422
        %v512 = vmul.f32 %v490, %v422
        %v513 = vmul.f32 %v492, %v422
        %v514 = vmul.f32 %v494, %v422
        %v515 = vmul.f32 %v496, %v422
        %v516 = vmul.f32 %v498, %v422
        %v517 = vmul.f32 %v500, %v422
        %v518 = vmul.f32 %v502, %v422
        %v519 = vadd.f32 %v503, 1e-05
        %v520 = vadd.f32 %v504, 1e-05
        %v521 = vadd.f32 %v505, 1e-05
        %v522 = vadd.f32 %v506, 1e-05
        %v523 = vadd.f32 %v507, 1e-05
        %v524 = vadd.f32 %v508, 1e-05
        %v525 = vadd.f32 %v509, 1e-05
        %v526 = vadd.f32 %v510, 1e-05
        %v527 = vadd.f32 %v511, 1e-05
        %v528 = vadd.f32 %v512, 1e-05
        %v529 = vadd.f32 %v513, 1e-05
        %v530 = vadd.f32 %v514, 1e-05
        %v531 = vadd.f32 %v515, 1e-05
        %v532 = vadd.f32 %v516, 1e-05
        %v533 = vadd.f32 %v517, 1e-05
        %v534 = vadd.f32 %v518, 1e-05
        %v535 = vrsqrt.pop %v519
        %v536 = vrsqrt.pop %v520
        %v537 = vrsqrt.pop %v521
        %v538 = vrsqrt.pop %v522
        %v539 = vrsqrt.pop %v523
        %v540 = vrsqrt.pop %v524
        %v541 = vrsqrt.pop %v525
        %v542 = vrsqrt.pop %v526
        %v543 = vrsqrt.pop %v527
        %v544 = vrsqrt.pop %v528
        %v545 = vrsqrt.pop %v529
        %v546 = vrsqrt.pop %v530
        %v547 = vrsqrt.pop %v531
        %v548 = vrsqrt.pop %v532
        %v549 = vrsqrt.pop %v533
        %v550 = vrsqrt.pop %v534
        %v551 = vmul.f32 %v439, %v535
        %v552 = vmul.f32 %v440, %v536
        %v553 = vmul.f32 %v441, %v537
        %v554 = vmul.f32 %v442, %v538
        %v555 = vmul.f32 %v443, %v539
        %v556 = vmul.f32 %v444, %v540
        %v557 = vmul.f32 %v445, %v541
        %v558 = vmul.f32 %v446, %v542
        %v559 = vmul.f32 %v447, %v543
        %v560 = vmul.f32 %v448, %v544
        %v561 = vmul.f32 %v449, %v545
        %v562 = vmul.f32 %v450, %v546
        %v563 = vmul.f32 %v451, %v547
        %v564 = vmul.f32 %v452, %v548
        %v565 = vmul.f32 %v453, %v549
        %v566 = vmul.f32 %v454, %v550
        %v567 = vmax.f32 %v551, 0.0
        %v568 = vmax.f32 %v552, 0.0
        %v569 = vmax.f32 %v553, 0.0
        %v570 = vmax.f32 %v554, 0.0
        %v571 = vmax.f32 %v555, 0.0
        %v572 = vmax.f32 %v556, 0.0
        %v573 = vmax.f32 %v557, 0.0
        %v574 = vmax.f32 %v558, 0.0
        %v575 = vmax.f32 %v559, 0.0
        %v576 = vmax.f32 %v560, 0.0
        %v577 = vmax.f32 %v561, 0.0
        %v578 = vmax.f32 %v562, 0.0
        %v579 = vmax.f32 %v563, 0.0
        %v580 = vmax.f32 %v564, 0.0
        %v581 = vmax.f32 %v565, 0.0
        %v582 = vmax.f32 %v566, 0.0
        %s583 = scalar_lea.vmem [#allocation5], 128
        %v584 = vld [vmem:[%s583] sm:$0xff]
        %v585 = vld [vmem:[%s583 + $0x8] sm:$0xff]
        %v586 = vld [vmem:[%s583 + $0x10] sm:$0xff]
        %v587 = vld [vmem:[%s583 + $0x18] sm:$0xff]
        %v588 = vld [vmem:[%s583 + $0x20] sm:$0xff]
        %v589 = vld [vmem:[%s583 + $0x28] sm:$0xff]
        %v590 = vld [vmem:[%s583 + $0x30] sm:$0xff]
        %v591 = vld [vmem:[%s583 + $0x38] sm:$0xff]
        %v592 = vld [vmem:[%s583 + $0x40] sm:$0xff]
        %v593 = vld [vmem:[%s583 + $0x48] sm:$0xff]
        %v594 = vld [vmem:[%s583 + $0x50] sm:$0xff]
        %v595 = vld [vmem:[%s583 + $0x58] sm:$0xff]
        %v596 = vld [vmem:[%s583 + $0x60] sm:$0xff]
        %v597 = vld [vmem:[%s583 + $0x68] sm:$0xff]
        %v598 = vld [vmem:[%s583 + $0x70] sm:$0xff]
        %v599 = vld [vmem:[%s583 + $0x78] sm:$0xff]
        %s600 = scalar_lea.vmem %s2, 1
        %v601 = vld [vmem:[%s600] sm:$0x1]
        %v603 = vlaneseq
        %v604 = vshrl.u32 %v603, 7
        %v605 = vsub.s32 0, %v604
        %v606 = vrot.slane %v601, %v605
        %608 = vmatprep.subr.mxu0 0.0
        %609 = vmatpush1.msra.mxu0 %v584
        %610 = vmatprep.subr.mxu0 0.0
        %611 = vmatpush1.msra.mxu0 %v585
        %612 = vmatprep.subr.mxu0 0.0
        %613 = vmatpush1.msra.mxu0 %v586
        %614 = vmatprep.subr.mxu0 0.0
        %615 = vmatpush1.msra.mxu0 %v587
        %616 = vmatprep.subr.mxu0 0.0
        %617 = vmatpush1.msra.mxu0 %v588
        %618 = vmatprep.subr.mxu0 0.0
        %619 = vmatpush1.msra.mxu0 %v589
        %620 = vmatprep.subr.mxu0 0.0
        %621 = vmatpush1.msra.mxu0 %v590
        %622 = vmatprep.subr.mxu0 0.0
        %623 = vmatpush1.msra.mxu0 %v591
        %624 = vmatprep.subr.mxu0 0.0
        %625 = vmatpush1.msra.mxu0 %v592
        %626 = vmatprep.subr.mxu0 0.0
        %627 = vmatpush1.msra.mxu0 %v593
        %628 = vmatprep.subr.mxu0 0.0
        %629 = vmatpush1.msra.mxu0 %v594
        %630 = vmatprep.subr.mxu0 0.0
        %631 = vmatpush1.msra.mxu0 %v595
        %632 = vmatprep.subr.mxu0 0.0
        %633 = vmatpush1.msra.mxu0 %v596
        %634 = vmatprep.subr.mxu0 0.0
        %635 = vmatpush1.msra.mxu0 %v597
        %636 = vmatprep.subr.mxu0 0.0
        %637 = vmatpush1.msra.mxu0 %v598
        %638 = vmatprep.subr.mxu0 0.0
        %639 = vmatpush1.msra.mxu0 %v599
        %640 = vmatprep.subr.mxu0 0.0
        %641 = vmatpush1.msra.mxu0 0.0
        %642 = vmatprep.subr.mxu0 0.0
        %643 = vmatpush1.msra.mxu0 0.0
        %644 = vmatprep.subr.mxu0 0.0
        %645 = vmatpush1.msra.mxu0 0.0
        %646 = vmatprep.subr.mxu0 0.0
        %647 = vmatpush1.msra.mxu0 0.0
        %648 = vmatprep.subr.mxu0 0.0
        %649 = vmatpush1.msra.mxu0 0.0
        %650 = vmatprep.subr.mxu0 0.0
        %651 = vmatpush1.msra.mxu0 0.0
        %652 = vmatprep.subr.mxu0 0.0
        %653 = vmatpush1.msra.mxu0 0.0
        %654 = vmatprep.subr.mxu0 0.0
        %655 = vmatpush1.msra.mxu0 0.0
        %656 = vmatprep.subr.mxu0 0.0
        %657 = vmatpush1.msra.mxu0 0.0
        %658 = vmatprep.subr.mxu0 0.0
        %659 = vmatpush1.msra.mxu0 0.0
        %660 = vmatprep.subr.mxu0 0.0
        %661 = vmatpush1.msra.mxu0 0.0
        %662 = vmatprep.subr.mxu0 0.0
        %663 = vmatpush1.msra.mxu0 0.0
        %664 = vmatprep.subr.mxu0 0.0
        %665 = vmatpush1.msra.mxu0 0.0
        %666 = vmatprep.subr.mxu0 0.0
        %667 = vmatpush1.msra.mxu0 0.0
        %668 = vmatprep.subr.mxu0 0.0
        %669 = vmatpush1.msra.mxu0 0.0
        %670 = vmatprep.subr.mxu0 0.0
        %671 = vmatpush1.msra.mxu0 0.0
        %672 = vmatprep.mubr.f32.mxu0 0.0
        %673 = vmatmul.mubr.f32.gmra.mrb[0].mxu0 %v567
        %v674 = vpop.f32.mrb[0].mxu0
        %v675 = vadd.f32 %v606, %v674
        %v676 = vpop.f32.mrb[0].mxu0
        %677 = vmatprep.mubr.f32.mxu0 0.0
        %678 = vmatmul.mubr.f32.gmra.mrb[0].mxu0 %v568
        %v679 = vpop.f32.mrb[0].mxu0
        %v680 = vadd.f32 %v606, %v679
        %v681 = vpop.f32.mrb[0].mxu0
        %682 = vmatprep.mubr.f32.mxu0 0.0
        %683 = vmatmul.mubr.f32.gmra.mrb[0].mxu0 %v569
        %v684 = vpop.f32.mrb[0].mxu0
        %v685 = vadd.f32 %v606, %v684
        %v686 = vpop.f32.mrb[0].mxu0
        %687 = vmatprep.mubr.f32.mxu0 0.0
        %688 = vmatmul.mubr.f32.gmra.mrb[0].mxu0 %v570
        %v689 = vpop.f32.mrb[0].mxu0
        %v690 = vadd.f32 %v606, %v689
        %v691 = vpop.f32.mrb[0].mxu0
        %692 = vmatprep.mubr.f32.mxu0 0.0
        %693 = vmatmul.mubr.f32.gmra.mrb[0].mxu0 %v571
        %v694 = vpop.f32.mrb[0].mxu0
        %v695 = vadd.f32 %v606, %v694
        %v696 = vpop.f32.mrb[0].mxu0
        %697 = vmatprep.mubr.f32.mxu0 0.0
        %698 = vmatmul.mubr.f32.gmra.mrb[0].mxu0 %v572
        %v699 = vpop.f32.mrb[0].mxu0
        %v700 = vadd.f32 %v606, %v699
        %v701 = vpop.f32.mrb[0].mxu0
        %702 = vmatprep.mubr.f32.mxu0 0.0
        %703 = vmatmul.mubr.f32.gmra.mrb[0].mxu0 %v573
        %v704 = vpop.f32.mrb[0].mxu0
        %v705 = vadd.f32 %v606, %v704
        %v706 = vpop.f32.mrb[0].mxu0
        %707 = vmatprep.mubr.f32.mxu0 0.0
        %708 = vmatmul.mubr.f32.gmra.mrb[0].mxu0 %v574
        %v709 = vpop.f32.mrb[0].mxu0
        %v710 = vadd.f32 %v606, %v709
        %v711 = vpop.f32.mrb[0].mxu0
        %712 = vmatprep.mubr.f32.mxu0 0.0
        %713 = vmatmul.mubr.f32.gmra.mrb[0].mxu0 %v575
        %v714 = vpop.f32.mrb[0].mxu0
        %v715 = vadd.f32 %v606, %v714
        %v716 = vpop.f32.mrb[0].mxu0
        %717 = vmatprep.mubr.f32.mxu0 0.0
        %718 = vmatmul.mubr.f32.gmra.mrb[0].mxu0 %v576
        %v719 = vpop.f32.mrb[0].mxu0
        %v720 = vadd.f32 %v606, %v719
        %v721 = vpop.f32.mrb[0].mxu0
        %722 = vmatprep.mubr.f32.mxu0 0.0
        %723 = vmatmul.mubr.f32.gmra.mrb[0].mxu0 %v577
        %v724 = vpop.f32.mrb[0].mxu0
        %v725 = vadd.f32 %v606, %v724
        %v726 = vpop.f32.mrb[0].mxu0
        %727 = vmatprep.mubr.f32.mxu0 0.0
        %728 = vmatmul.mubr.f32.gmra.mrb[0].mxu0 %v578
        %v729 = vpop.f32.mrb[0].mxu0
        %v730 = vadd.f32 %v606, %v729
        %v731 = vpop.f32.mrb[0].mxu0
        %732 = vmatprep.mubr.f32.mxu0 0.0
        %733 = vmatmul.mubr.f32.gmra.mrb[0].mxu0 %v579
        %v734 = vpop.f32.mrb[0].mxu0
        %v735 = vadd.f32 %v606, %v734
        %v736 = vpop.f32.mrb[0].mxu0
        %737 = vmatprep.mubr.f32.mxu0 0.0
        %738 = vmatmul.mubr.f32.gmra.mrb[0].mxu0 %v580
        %v739 = vpop.f32.mrb[0].mxu0
        %v740 = vadd.f32 %v606, %v739
        %v741 = vpop.f32.mrb[0].mxu0
        %742 = vmatprep.mubr.f32.mxu0 0.0
        %743 = vmatmul.mubr.f32.gmra.mrb[0].mxu0 %v581
        %v744 = vpop.f32.mrb[0].mxu0
        %v745 = vadd.f32 %v606, %v744
        %v746 = vpop.f32.mrb[0].mxu0
        %747 = vmatprep.mubr.f32.mxu0 0.0
        %748 = vmatmul.mubr.f32.gmra.mrb[0].mxu0 %v582
        %v749 = vpop.f32.mrb[0].mxu0
        %v750 = vadd.f32 %v606, %v749
        %v751 = vpop.f32.mrb[0].mxu0
        %752 = vdwg.mxu0
        %753 = vadd.xlane.f32.xlu0 %v675
        %v754 = vpop.xlane.xlu0 %753
        %755 = vadd.xlane.f32.xlu0 %v680
        %v756 = vpop.xlane.xlu0 %755
        %757 = vadd.xlane.f32.xlu0 %v685
        %v758 = vpop.xlane.xlu0 %757
        %759 = vadd.xlane.f32.xlu0 %v690
        %v760 = vpop.xlane.xlu0 %759
        %761 = vadd.xlane.f32.xlu0 %v695
        %v762 = vpop.xlane.xlu0 %761
        %763 = vadd.xlane.f32.xlu0 %v700
        %v764 = vpop.xlane.xlu0 %763
        %765 = vadd.xlane.f32.xlu0 %v705
        %v766 = vpop.xlane.xlu0 %765
        %767 = vadd.xlane.f32.xlu0 %v710
        %v768 = vpop.xlane.xlu0 %767
        %769 = vadd.xlane.f32.xlu0 %v715
        %v770 = vpop.xlane.xlu0 %769
        %771 = vadd.xlane.f32.xlu0 %v720
        %v772 = vpop.xlane.xlu0 %771
        %773 = vadd.xlane.f32.xlu0 %v725
        %v774 = vpop.xlane.xlu0 %773
        %775 = vadd.xlane.f32.xlu0 %v730
        %v776 = vpop.xlane.xlu0 %775
        %777 = vadd.xlane.f32.xlu0 %v735
        %v778 = vpop.xlane.xlu0 %777
        %779 = vadd.xlane.f32.xlu0 %v740
        %v780 = vpop.xlane.xlu0 %779
        %781 = vadd.xlane.f32.xlu0 %v745
        %v782 = vpop.xlane.xlu0 %781
        %783 = vadd.xlane.f32.xlu0 %v750
        %v784 = vpop.xlane.xlu0 %783
        %v785 = vmul.f32 %v754, %v422
        %v786 = vmul.f32 %v756, %v422
        %v787 = vmul.f32 %v758, %v422
        %v788 = vmul.f32 %v760, %v422
        %v789 = vmul.f32 %v762, %v422
        %v790 = vmul.f32 %v764, %v422
        %v791 = vmul.f32 %v766, %v422
        %v792 = vmul.f32 %v768, %v422
        %v793 = vmul.f32 %v770, %v422
        %v794 = vmul.f32 %v772, %v422
        %v795 = vmul.f32 %v774, %v422
        %v796 = vmul.f32 %v776, %v422
        %v797 = vmul.f32 %v778, %v422
        %v798 = vmul.f32 %v780, %v422
        %v799 = vmul.f32 %v782, %v422
        %v800 = vmul.f32 %v784, %v422
        %v801 = vsub.f32 %v675, %v785
        %v802 = vsub.f32 %v680, %v786
        %v803 = vsub.f32 %v685, %v787
        %v804 = vsub.f32 %v690, %v788
        %v805 = vsub.f32 %v695, %v789
        %v806 = vsub.f32 %v700, %v790
        %v807 = vsub.f32 %v705, %v791
        %v808 = vsub.f32 %v710, %v792
        %v809 = vsub.f32 %v715, %v793
        %v810 = vsub.f32 %v720, %v794
        %v811 = vsub.f32 %v725, %v795
        %v812 = vsub.f32 %v730, %v796
        %v813 = vsub.f32 %v735, %v797
        %v814 = vsub.f32 %v740, %v798
        %v815 = vsub.f32 %v745, %v799
        %v816 = vsub.f32 %v750, %v800
        %v817 = vmul.f32 %v801, %v801
        %v818 = vmul.f32 %v802, %v802
        %v819 = vmul.f32 %v803, %v803
        %v820 = vmul.f32 %v804, %v804
        %v821 = vmul.f32 %v805, %v805
        %v822 = vmul.f32 %v806, %v806
        %v823 = vmul.f32 %v807, %v807
        %v824 = vmul.f32 %v808, %v808
        %v825 = vmul.f32 %v809, %v809
        %v826 = vmul.f32 %v810, %v810
        %v827 = vmul.f32 %v811, %v811
        %v828 = vmul.f32 %v812, %v812
        %v829 = vmul.f32 %v813, %v813
        %v830 = vmul.f32 %v814, %v814
        %v831 = vmul.f32 %v815, %v815
        %v832 = vmul.f32 %v816, %v816
        %833 = vadd.xlane.f32.xlu0 %v817
        %v834 = vpop.xlane.xlu0 %833
        %835 = vadd.xlane.f32.xlu0 %v818
        %v836 = vpop.xlane.xlu0 %835
        %837 = vadd.xlane.f32.xlu0 %v819
        %v838 = vpop.xlane.xlu0 %837
        %839 = vadd.xlane.f32.xlu0 %v820
        %v840 = vpop.xlane.xlu0 %839
        %841 = vadd.xlane.f32.xlu0 %v821
        %v842 = vpop.xlane.xlu0 %841
        %843 = vadd.xlane.f32.xlu0 %v822
        %v844 = vpop.xlane.xlu0 %843
        %845 = vadd.xlane.f32.xlu0 %v823
        %v846 = vpop.xlane.xlu0 %845
        %847 = vadd.xlane.f32.xlu0 %v824
        %v848 = vpop.xlane.xlu0 %847
        %849 = vadd.xlane.f32.xlu0 %v825
        %v850 = vpop.xlane.xlu0 %849
        %851 = vadd.xlane.f32.xlu0 %v826
        %v852 = vpop.xlane.xlu0 %851
        %853 = vadd.xlane.f32.xlu0 %v827
        %v854 = vpop.xlane.xlu0 %853
        %855 = vadd.xlane.f32.xlu0 %v828
        %v856 = vpop.xlane.xlu0 %855
        %857 = vadd.xlane.f32.xlu0 %v829
        %v858 = vpop.xlane.xlu0 %857
        %859 = vadd.xlane.f32.xlu0 %v830
        %v860 = vpop.xlane.xlu0 %859
        %861 = vadd.xlane.f32.xlu0 %v831
        %v862 = vpop.xlane.xlu0 %861
        %863 = vadd.xlane.f32.xlu0 %v832
        %v864 = vpop.xlane.xlu0 %863
        %v865 = vmul.f32 %v834, %v422
        %v866 = vmul.f32 %v836, %v422
        %v867 = vmul.f32 %v838, %v422
        %v868 = vmul.f32 %v840, %v422
        %v869 = vmul.f32 %v842, %v422
        %v870 = vmul.f32 %v844, %v422
        %v871 = vmul.f32 %v846, %v422
        %v872 = vmul.f32 %v848, %v422
        %v873 = vmul.f32 %v850, %v422
        %v874 = vmul.f32 %v852, %v422
        %v875 = vmul.f32 %v854, %v422
        %v876 = vmul.f32 %v856, %v422
        %v877 = vmul.f32 %v858, %v422
        %v878 = vmul.f32 %v860, %v422
        %v879 = vmul.f32 %v862, %v422
        %v880 = vmul.f32 %v864, %v422
        %v881 = vadd.f32 %v865, 1e-05
        %v882 = vadd.f32 %v866, 1e-05
        %v883 = vadd.f32 %v867, 1e-05
        %v884 = vadd.f32 %v868, 1e-05
        %v885 = vadd.f32 %v869, 1e-05
        %v886 = vadd.f32 %v870, 1e-05
        %v887 = vadd.f32 %v871, 1e-05
        %v888 = vadd.f32 %v872, 1e-05
        %v889 = vadd.f32 %v873, 1e-05
        %v890 = vadd.f32 %v874, 1e-05
        %v891 = vadd.f32 %v875, 1e-05
        %v892 = vadd.f32 %v876, 1e-05
        %v893 = vadd.f32 %v877, 1e-05
        %v894 = vadd.f32 %v878, 1e-05
        %v895 = vadd.f32 %v879, 1e-05
        %v896 = vadd.f32 %v880, 1e-05
        %v897 = vrsqrt.pop %v881
        %v898 = vrsqrt.pop %v882
        %v899 = vrsqrt.pop %v883
        %v900 = vrsqrt.pop %v884
        %v901 = vrsqrt.pop %v885
        %v902 = vrsqrt.pop %v886
        %v903 = vrsqrt.pop %v887
        %v904 = vrsqrt.pop %v888
        %v905 = vrsqrt.pop %v889
        %v906 = vrsqrt.pop %v890
        %v907 = vrsqrt.pop %v891
        %v908 = vrsqrt.pop %v892
        %v909 = vrsqrt.pop %v893
        %v910 = vrsqrt.pop %v894
        %v911 = vrsqrt.pop %v895
        %v912 = vrsqrt.pop %v896
        %v913 = vmul.f32 %v801, %v897
        %v914 = vmul.f32 %v802, %v898
        %v915 = vmul.f32 %v803, %v899
        %v916 = vmul.f32 %v804, %v900
        %v917 = vmul.f32 %v805, %v901
        %v918 = vmul.f32 %v806, %v902
        %v919 = vmul.f32 %v807, %v903
        %v920 = vmul.f32 %v808, %v904
        %v921 = vmul.f32 %v809, %v905
        %v922 = vmul.f32 %v810, %v906
        %v923 = vmul.f32 %v811, %v907
        %v924 = vmul.f32 %v812, %v908
        %v925 = vmul.f32 %v813, %v909
        %v926 = vmul.f32 %v814, %v910
        %v927 = vmul.f32 %v815, %v911
        %v928 = vmul.f32 %v816, %v912
        %v929 = vmax.f32 %v913, 0.0
        %v930 = vmax.f32 %v914, 0.0
        %v931 = vmax.f32 %v915, 0.0
        %v932 = vmax.f32 %v916, 0.0
        %v933 = vmax.f32 %v917, 0.0
        %v934 = vmax.f32 %v918, 0.0
        %v935 = vmax.f32 %v919, 0.0
        %v936 = vmax.f32 %v920, 0.0
        %v937 = vmax.f32 %v921, 0.0
        %v938 = vmax.f32 %v922, 0.0
        %v939 = vmax.f32 %v923, 0.0
        %v940 = vmax.f32 %v924, 0.0
        %v941 = vmax.f32 %v925, 0.0
        %v942 = vmax.f32 %v926, 0.0
        %v943 = vmax.f32 %v927, 0.0
        %v944 = vmax.f32 %v928, 0.0
        %s945 = scalar_lea.vmem [#allocation5], 256
        %v946 = vld [vmem:[%s945] sm:$0xff]
        %v947 = vld [vmem:[%s945 + $0x8] sm:$0xff]
        %v948 = vld [vmem:[%s945 + $0x10] sm:$0xff]
        %v949 = vld [vmem:[%s945 + $0x18] sm:$0xff]
        %v950 = vld [vmem:[%s945 + $0x20] sm:$0xff]
        %v951 = vld [vmem:[%s945 + $0x28] sm:$0xff]
        %v952 = vld [vmem:[%s945 + $0x30] sm:$0xff]
        %v953 = vld [vmem:[%s945 + $0x38] sm:$0xff]
        %v954 = vld [vmem:[%s945 + $0x40] sm:$0xff]
        %v955 = vld [vmem:[%s945 + $0x48] sm:$0xff]
        %v956 = vld [vmem:[%s945 + $0x50] sm:$0xff]
        %v957 = vld [vmem:[%s945 + $0x58] sm:$0xff]
        %v958 = vld [vmem:[%s945 + $0x60] sm:$0xff]
        %v959 = vld [vmem:[%s945 + $0x68] sm:$0xff]
        %v960 = vld [vmem:[%s945 + $0x70] sm:$0xff]
        %v961 = vld [vmem:[%s945 + $0x78] sm:$0xff]
        %s962 = scalar_lea.vmem %s2, 2
        %v963 = vld [vmem:[%s962] sm:$0x1]
        %v965 = vlaneseq
        %v966 = vshrl.u32 %v965, 7
        %v967 = vsub.s32 0, %v966
        %v968 = vrot.slane %v963, %v967
        %970 = vmatprep.subr.mxu0 0.0
        %971 = vmatpush1.msra.mxu0 %v946
        %972 = vmatprep.subr.mxu0 0.0
        %973 = vmatpush1.msra.mxu0 %v947
        %974 = vmatprep.subr.mxu0 0.0
        %975 = vmatpush1.msra.mxu0 %v948
        %976 = vmatprep.subr.mxu0 0.0
        %977 = vmatpush1.msra.mxu0 %v949
        %978 = vmatprep.subr.mxu0 0.0
        %979 = vmatpush1.msra.mxu0 %v950
        %980 = vmatprep.subr.mxu0 0.0
        %981 = vmatpush1.msra.mxu0 %v951
        %982 = vmatprep.subr.mxu0 0.0
        %983 = vmatpush1.msra.mxu0 %v952
        %984 = vmatprep.subr.mxu0 0.0
        %985 = vmatpush1.msra.mxu0 %v953
        %986 = vmatprep.subr.mxu0 0.0
        %987 = vmatpush1.msra.mxu0 %v954
        %988 = vmatprep.subr.mxu0 0.0
        %989 = vmatpush1.msra.mxu0 %v955
        %990 = vmatprep.subr.mxu0 0.0
        %991 = vmatpush1.msra.mxu0 %v956
        %992 = vmatprep.subr.mxu0 0.0
        %993 = vmatpush1.msra.mxu0 %v957
        %994 = vmatprep.subr.mxu0 0.0
        %995 = vmatpush1.msra.mxu0 %v958
        %996 = vmatprep.subr.mxu0 0.0
        %997 = vmatpush1.msra.mxu0 %v959
        %998 = vmatprep.subr.mxu0 0.0
        %999 = vmatpush1.msra.mxu0 %v960
        %1000 = vmatprep.subr.mxu0 0.0
        %1001 = vmatpush1.msra.mxu0 %v961
        %1002 = vmatprep.subr.mxu0 0.0
        %1003 = vmatpush1.msra.mxu0 0.0
        %1004 = vmatprep.subr.mxu0 0.0
        %1005 = vmatpush1.msra.mxu0 0.0
        %1006 = vmatprep.subr.mxu0 0.0
        %1007 = vmatpush1.msra.mxu0 0.0
        %1008 = vmatprep.subr.mxu0 0.0
        %1009 = vmatpush1.msra.mxu0 0.0
        %1010 = vmatprep.subr.mxu0 0.0
        %1011 = vmatpush1.msra.mxu0 0.0
        %1012 = vmatprep.subr.mxu0 0.0
        %1013 = vmatpush1.msra.mxu0 0.0
        %1014 = vmatprep.subr.mxu0 0.0
        %1015 = vmatpush1.msra.mxu0 0.0
        %1016 = vmatprep.subr.mxu0 0.0
        %1017 = vmatpush1.msra.mxu0 0.0
        %1018 = vmatprep.subr.mxu0 0.0
        %1019 = vmatpush1.msra.mxu0 0.0
        %1020 = vmatprep.subr.mxu0 0.0
        %1021 = vmatpush1.msra.mxu0 0.0
        %1022 = vmatprep.subr.mxu0 0.0
        %1023 = vmatpush1.msra.mxu0 0.0
        %1024 = vmatprep.subr.mxu0 0.0
        %1025 = vmatpush1.msra.mxu0 0.0
        %1026 = vmatprep.subr.mxu0 0.0
        %1027 = vmatpush1.msra.mxu0 0.0
        %1028 = vmatprep.subr.mxu0 0.0
        %1029 = vmatpush1.msra.mxu0 0.0
        %1030 = vmatprep.subr.mxu0 0.0
        %1031 = vmatpush1.msra.mxu0 0.0
        %1032 = vmatprep.subr.mxu0 0.0
        %1033 = vmatpush1.msra.mxu0 0.0
        %1034 = vmatprep.mubr.f32.mxu0 0.0
        %1035 = vmatmul.mubr.f32.gmra.mrb[0].mxu0 %v929
        %v1036 = vpop.f32.mrb[0].mxu0
        %v1037 = vadd.f32 %v968, %v1036
        %v1038 = vpop.f32.mrb[0].mxu0
        %1039 = vmatprep.mubr.f32.mxu0 0.0
        %1040 = vmatmul.mubr.f32.gmra.mrb[0].mxu0 %v930
        %v1041 = vpop.f32.mrb[0].mxu0
        %v1042 = vadd.f32 %v968, %v1041
        %v1043 = vpop.f32.mrb[0].mxu0
        %1044 = vmatprep.mubr.f32.mxu0 0.0
        %1045 = vmatmul.mubr.f32.gmra.mrb[0].mxu0 %v931
        %v1046 = vpop.f32.mrb[0].mxu0
        %v1047 = vadd.f32 %v968, %v1046
        %v1048 = vpop.f32.mrb[0].mxu0
        %1049 = vmatprep.mubr.f32.mxu0 0.0
        %1050 = vmatmul.mubr.f32.gmra.mrb[0].mxu0 %v932
        %v1051 = vpop.f32.mrb[0].mxu0
        %v1052 = vadd.f32 %v968, %v1051
        %v1053 = vpop.f32.mrb[0].mxu0
        %1054 = vmatprep.mubr.f32.mxu0 0.0
        %1055 = vmatmul.mubr.f32.gmra.mrb[0].mxu0 %v933
        %v1056 = vpop.f32.mrb[0].mxu0
        %v1057 = vadd.f32 %v968, %v1056
        %v1058 = vpop.f32.mrb[0].mxu0
        %1059 = vmatprep.mubr.f32.mxu0 0.0
        %1060 = vmatmul.mubr.f32.gmra.mrb[0].mxu0 %v934
        %v1061 = vpop.f32.mrb[0].mxu0
        %v1062 = vadd.f32 %v968, %v1061
        %v1063 = vpop.f32.mrb[0].mxu0
        %1064 = vmatprep.mubr.f32.mxu0 0.0
        %1065 = vmatmul.mubr.f32.gmra.mrb[0].mxu0 %v935
        %v1066 = vpop.f32.mrb[0].mxu0
        %v1067 = vadd.f32 %v968, %v1066
        %v1068 = vpop.f32.mrb[0].mxu0
        %1069 = vmatprep.mubr.f32.mxu0 0.0
        %1070 = vmatmul.mubr.f32.gmra.mrb[0].mxu0 %v936
        %v1071 = vpop.f32.mrb[0].mxu0
        %v1072 = vadd.f32 %v968, %v1071
        %v1073 = vpop.f32.mrb[0].mxu0
        %1074 = vmatprep.mubr.f32.mxu0 0.0
        %1075 = vmatmul.mubr.f32.gmra.mrb[0].mxu0 %v937
        %v1076 = vpop.f32.mrb[0].mxu0
        %v1077 = vadd.f32 %v968, %v1076
        %v1078 = vpop.f32.mrb[0].mxu0
        %1079 = vmatprep.mubr.f32.mxu0 0.0
        %1080 = vmatmul.mubr.f32.gmra.mrb[0].mxu0 %v938
        %v1081 = vpop.f32.mrb[0].mxu0
        %v1082 = vadd.f32 %v968, %v1081
        %v1083 = vpop.f32.mrb[0].mxu0
        %1084 = vmatprep.mubr.f32.mxu0 0.0
        %1085 = vmatmul.mubr.f32.gmra.mrb[0].mxu0 %v939
        %v1086 = vpop.f32.mrb[0].mxu0
        %v1087 = vadd.f32 %v968, %v1086
        %v1088 = vpop.f32.mrb[0].mxu0
        %1089 = vmatprep.mubr.f32.mxu0 0.0
        %1090 = vmatmul.mubr.f32.gmra.mrb[0].mxu0 %v940
        %v1091 = vpop.f32.mrb[0].mxu0
        %v1092 = vadd.f32 %v968, %v1091
        %v1093 = vpop.f32.mrb[0].mxu0
        %1094 = vmatprep.mubr.f32.mxu0 0.0
        %1095 = vmatmul.mubr.f32.gmra.mrb[0].mxu0 %v941
        %v1096 = vpop.f32.mrb[0].mxu0
        %v1097 = vadd.f32 %v968, %v1096
        %v1098 = vpop.f32.mrb[0].mxu0
        %1099 = vmatprep.mubr.f32.mxu0 0.0
        %1100 = vmatmul.mubr.f32.gmra.mrb[0].mxu0 %v942
        %v1101 = vpop.f32.mrb[0].mxu0
        %v1102 = vadd.f32 %v968, %v1101
        %v1103 = vpop.f32.mrb[0].mxu0
        %1104 = vmatprep.mubr.f32.mxu0 0.0
        %1105 = vmatmul.mubr.f32.gmra.mrb[0].mxu0 %v943
        %v1106 = vpop.f32.mrb[0].mxu0
        %v1107 = vadd.f32 %v968, %v1106
        %v1108 = vpop.f32.mrb[0].mxu0
        %1109 = vmatprep.mubr.f32.mxu0 0.0
        %1110 = vmatmul.mubr.f32.gmra.mrb[0].mxu0 %v944
        %v1111 = vpop.f32.mrb[0].mxu0
        %v1112 = vadd.f32 %v968, %v1111
        %v1113 = vpop.f32.mrb[0].mxu0
        %1114 = vdwg.mxu0
        %1115 = vadd.xlane.f32.xlu0 %v1037
        %v1116 = vpop.xlane.xlu0 %1115
        %1117 = vadd.xlane.f32.xlu0 %v1042
        %v1118 = vpop.xlane.xlu0 %1117
        %1119 = vadd.xlane.f32.xlu0 %v1047
        %v1120 = vpop.xlane.xlu0 %1119
        %1121 = vadd.xlane.f32.xlu0 %v1052
        %v1122 = vpop.xlane.xlu0 %1121
        %1123 = vadd.xlane.f32.xlu0 %v1057
        %v1124 = vpop.xlane.xlu0 %1123
        %1125 = vadd.xlane.f32.xlu0 %v1062
        %v1126 = vpop.xlane.xlu0 %1125
        %1127 = vadd.xlane.f32.xlu0 %v1067
        %v1128 = vpop.xlane.xlu0 %1127
        %1129 = vadd.xlane.f32.xlu0 %v1072
        %v1130 = vpop.xlane.xlu0 %1129
        %1131 = vadd.xlane.f32.xlu0 %v1077
        %v1132 = vpop.xlane.xlu0 %1131
        %1133 = vadd.xlane.f32.xlu0 %v1082
        %v1134 = vpop.xlane.xlu0 %1133
        %1135 = vadd.xlane.f32.xlu0 %v1087
        %v1136 = vpop.xlane.xlu0 %1135
        %1137 = vadd.xlane.f32.xlu0 %v1092
        %v1138 = vpop.xlane.xlu0 %1137
        %1139 = vadd.xlane.f32.xlu0 %v1097
        %v1140 = vpop.xlane.xlu0 %1139
        %1141 = vadd.xlane.f32.xlu0 %v1102
        %v1142 = vpop.xlane.xlu0 %1141
        %1143 = vadd.xlane.f32.xlu0 %v1107
        %v1144 = vpop.xlane.xlu0 %1143
        %1145 = vadd.xlane.f32.xlu0 %v1112
        %v1146 = vpop.xlane.xlu0 %1145
        %v1147 = vmul.f32 %v1116, %v422
        %v1148 = vmul.f32 %v1118, %v422
        %v1149 = vmul.f32 %v1120, %v422
        %v1150 = vmul.f32 %v1122, %v422
        %v1151 = vmul.f32 %v1124, %v422
        %v1152 = vmul.f32 %v1126, %v422
        %v1153 = vmul.f32 %v1128, %v422
        %v1154 = vmul.f32 %v1130, %v422
        %v1155 = vmul.f32 %v1132, %v422
        %v1156 = vmul.f32 %v1134, %v422
        %v1157 = vmul.f32 %v1136, %v422
        %v1158 = vmul.f32 %v1138, %v422
        %v1159 = vmul.f32 %v1140, %v422
        %v1160 = vmul.f32 %v1142, %v422
        %v1161 = vmul.f32 %v1144, %v422
        %v1162 = vmul.f32 %v1146, %v422
        %v1163 = vsub.f32 %v1037, %v1147
        %v1164 = vsub.f32 %v1042, %v1148
        %v1165 = vsub.f32 %v1047, %v1149
        %v1166 = vsub.f32 %v1052, %v1150
        %v1167 = vsub.f32 %v1057, %v1151
        %v1168 = vsub.f32 %v1062, %v1152
        %v1169 = vsub.f32 %v1067, %v1153
        %v1170 = vsub.f32 %v1072, %v1154
        %v1171 = vsub.f32 %v1077, %v1155
        %v1172 = vsub.f32 %v1082, %v1156
        %v1173 = vsub.f32 %v1087, %v1157
        %v1174 = vsub.f32 %v1092, %v1158
        %v1175 = vsub.f32 %v1097, %v1159
        %v1176 = vsub.f32 %v1102, %v1160
        %v1177 = vsub.f32 %v1107, %v1161
        %v1178 = vsub.f32 %v1112, %v1162
        %v1179 = vmul.f32 %v1163, %v1163
        %v1180 = vmul.f32 %v1164, %v1164
        %v1181 = vmul.f32 %v1165, %v1165
        %v1182 = vmul.f32 %v1166, %v1166
        %v1183 = vmul.f32 %v1167, %v1167
        %v1184 = vmul.f32 %v1168, %v1168
        %v1185 = vmul.f32 %v1169, %v1169
        %v1186 = vmul.f32 %v1170, %v1170
        %v1187 = vmul.f32 %v1171, %v1171
        %v1188 = vmul.f32 %v1172, %v1172
        %v1189 = vmul.f32 %v1173, %v1173
        %v1190 = vmul.f32 %v1174, %v1174
        %v1191 = vmul.f32 %v1175, %v1175
        %v1192 = vmul.f32 %v1176, %v1176
        %v1193 = vmul.f32 %v1177, %v1177
        %v1194 = vmul.f32 %v1178, %v1178
        %1195 = vadd.xlane.f32.xlu0 %v1179
        %v1196 = vpop.xlane.xlu0 %1195
        %1197 = vadd.xlane.f32.xlu0 %v1180
        %v1198 = vpop.xlane.xlu0 %1197
        %1199 = vadd.xlane.f32.xlu0 %v1181
        %v1200 = vpop.xlane.xlu0 %1199
        %1201 = vadd.xlane.f32.xlu0 %v1182
        %v1202 = vpop.xlane.xlu0 %1201
        %1203 = vadd.xlane.f32.xlu0 %v1183
        %v1204 = vpop.xlane.xlu0 %1203
        %1205 = vadd.xlane.f32.xlu0 %v1184
        %v1206 = vpop.xlane.xlu0 %1205
        %1207 = vadd.xlane.f32.xlu0 %v1185
        %v1208 = vpop.xlane.xlu0 %1207
        %1209 = vadd.xlane.f32.xlu0 %v1186
        %v1210 = vpop.xlane.xlu0 %1209
        %1211 = vadd.xlane.f32.xlu0 %v1187
        %v1212 = vpop.xlane.xlu0 %1211
        %1213 = vadd.xlane.f32.xlu0 %v1188
        %v1214 = vpop.xlane.xlu0 %1213
        %1215 = vadd.xlane.f32.xlu0 %v1189
        %v1216 = vpop.xlane.xlu0 %1215
        %1217 = vadd.xlane.f32.xlu0 %v1190
        %v1218 = vpop.xlane.xlu0 %1217
        %1219 = vadd.xlane.f32.xlu0 %v1191
        %v1220 = vpop.xlane.xlu0 %1219
        %1221 = vadd.xlane.f32.xlu0 %v1192
        %v1222 = vpop.xlane.xlu0 %1221
        %1223 = vadd.xlane.f32.xlu0 %v1193
        %v1224 = vpop.xlane.xlu0 %1223
        %1225 = vadd.xlane.f32.xlu0 %v1194
        %v1226 = vpop.xlane.xlu0 %1225
        %v1227 = vmul.f32 %v1196, %v422
        %v1228 = vmul.f32 %v1198, %v422
        %v1229 = vmul.f32 %v1200, %v422
        %v1230 = vmul.f32 %v1202, %v422
        %v1231 = vmul.f32 %v1204, %v422
        %v1232 = vmul.f32 %v1206, %v422
        %v1233 = vmul.f32 %v1208, %v422
        %v1234 = vmul.f32 %v1210, %v422
        %v1235 = vmul.f32 %v1212, %v422
        %v1236 = vmul.f32 %v1214, %v422
        %v1237 = vmul.f32 %v1216, %v422
        %v1238 = vmul.f32 %v1218, %v422
        %v1239 = vmul.f32 %v1220, %v422
        %v1240 = vmul.f32 %v1222, %v422
        %v1241 = vmul.f32 %v1224, %v422
        %v1242 = vmul.f32 %v1226, %v422
        %v1243 = vadd.f32 %v1227, 1e-05
        %v1244 = vadd.f32 %v1228, 1e-05
        %v1245 = vadd.f32 %v1229, 1e-05
        %v1246 = vadd.f32 %v1230, 1e-05
        %v1247 = vadd.f32 %v1231, 1e-05
        %v1248 = vadd.f32 %v1232, 1e-05
        %v1249 = vadd.f32 %v1233, 1e-05
        %v1250 = vadd.f32 %v1234, 1e-05
        %v1251 = vadd.f32 %v1235, 1e-05
        %v1252 = vadd.f32 %v1236, 1e-05
        %v1253 = vadd.f32 %v1237, 1e-05
        %v1254 = vadd.f32 %v1238, 1e-05
        %v1255 = vadd.f32 %v1239, 1e-05
        %v1256 = vadd.f32 %v1240, 1e-05
        %v1257 = vadd.f32 %v1241, 1e-05
        %v1258 = vadd.f32 %v1242, 1e-05
        %v1259 = vrsqrt.pop %v1243
        %v1260 = vrsqrt.pop %v1244
        %v1261 = vrsqrt.pop %v1245
        %v1262 = vrsqrt.pop %v1246
        %v1263 = vrsqrt.pop %v1247
        %v1264 = vrsqrt.pop %v1248
        %v1265 = vrsqrt.pop %v1249
        %v1266 = vrsqrt.pop %v1250
        %v1267 = vrsqrt.pop %v1251
        %v1268 = vrsqrt.pop %v1252
        %v1269 = vrsqrt.pop %v1253
        %v1270 = vrsqrt.pop %v1254
        %v1271 = vrsqrt.pop %v1255
        %v1272 = vrsqrt.pop %v1256
        %v1273 = vrsqrt.pop %v1257
        %v1274 = vrsqrt.pop %v1258
        %v1275 = vmul.f32 %v1163, %v1259
        %v1276 = vmul.f32 %v1164, %v1260
        %v1277 = vmul.f32 %v1165, %v1261
        %v1278 = vmul.f32 %v1166, %v1262
        %v1279 = vmul.f32 %v1167, %v1263
        %v1280 = vmul.f32 %v1168, %v1264
        %v1281 = vmul.f32 %v1169, %v1265
        %v1282 = vmul.f32 %v1170, %v1266
        %v1283 = vmul.f32 %v1171, %v1267
        %v1284 = vmul.f32 %v1172, %v1268
        %v1285 = vmul.f32 %v1173, %v1269
        %v1286 = vmul.f32 %v1174, %v1270
        %v1287 = vmul.f32 %v1175, %v1271
        %v1288 = vmul.f32 %v1176, %v1272
        %v1289 = vmul.f32 %v1177, %v1273
        %v1290 = vmul.f32 %v1178, %v1274
        %v1291 = vmax.f32 %v1275, 0.0
        %v1292 = vmax.f32 %v1276, 0.0
        %v1293 = vmax.f32 %v1277, 0.0
        %v1294 = vmax.f32 %v1278, 0.0
        %v1295 = vmax.f32 %v1279, 0.0
        %v1296 = vmax.f32 %v1280, 0.0
        %v1297 = vmax.f32 %v1281, 0.0
        %v1298 = vmax.f32 %v1282, 0.0
        %v1299 = vmax.f32 %v1283, 0.0
        %v1300 = vmax.f32 %v1284, 0.0
        %v1301 = vmax.f32 %v1285, 0.0
        %v1302 = vmax.f32 %v1286, 0.0
        %v1303 = vmax.f32 %v1287, 0.0
        %v1304 = vmax.f32 %v1288, 0.0
        %v1305 = vmax.f32 %v1289, 0.0
        %v1306 = vmax.f32 %v1290, 0.0
        %s1307 = scalar_lea.vmem [#allocation5], 384
        %v1308 = vld [vmem:[%s1307] sm:$0xff]
        %v1309 = vld [vmem:[%s1307 + $0x8] sm:$0xff]
        %v1310 = vld [vmem:[%s1307 + $0x10] sm:$0xff]
        %v1311 = vld [vmem:[%s1307 + $0x18] sm:$0xff]
        %v1312 = vld [vmem:[%s1307 + $0x20] sm:$0xff]
        %v1313 = vld [vmem:[%s1307 + $0x28] sm:$0xff]
        %v1314 = vld [vmem:[%s1307 + $0x30] sm:$0xff]
        %v1315 = vld [vmem:[%s1307 + $0x38] sm:$0xff]
        %v1316 = vld [vmem:[%s1307 + $0x40] sm:$0xff]
        %v1317 = vld [vmem:[%s1307 + $0x48] sm:$0xff]
        %v1318 = vld [vmem:[%s1307 + $0x50] sm:$0xff]
        %v1319 = vld [vmem:[%s1307 + $0x58] sm:$0xff]
        %v1320 = vld [vmem:[%s1307 + $0x60] sm:$0xff]
        %v1321 = vld [vmem:[%s1307 + $0x68] sm:$0xff]
        %v1322 = vld [vmem:[%s1307 + $0x70] sm:$0xff]
        %v1323 = vld [vmem:[%s1307 + $0x78] sm:$0xff]
        %s1324 = scalar_lea.vmem %s2, 3
        %v1325 = vld [vmem:[%s1324] sm:$0x1]
        %v1327 = vlaneseq
        %v1328 = vshrl.u32 %v1327, 7
        %v1329 = vsub.s32 0, %v1328
        %v1330 = vrot.slane %v1325, %v1329
        %1332 = vmatprep.subr.mxu0 0.0
        %1333 = vmatpush1.msra.mxu0 %v1308
        %1334 = vmatprep.subr.mxu0 0.0
        %1335 = vmatpush1.msra.mxu0 %v1309
        %1336 = vmatprep.subr.mxu0 0.0
        %1337 = vmatpush1.msra.mxu0 %v1310
        %1338 = vmatprep.subr.mxu0 0.0
        %1339 = vmatpush1.msra.mxu0 %v1311
        %1340 = vmatprep.subr.mxu0 0.0
        %1341 = vmatpush1.msra.mxu0 %v1312
        %1342 = vmatprep.subr.mxu0 0.0
        %1343 = vmatpush1.msra.mxu0 %v1313
        %1344 = vmatprep.subr.mxu0 0.0
        %1345 = vmatpush1.msra.mxu0 %v1314
        %1346 = vmatprep.subr.mxu0 0.0
        %1347 = vmatpush1.msra.mxu0 %v1315
        %1348 = vmatprep.subr.mxu0 0.0
        %1349 = vmatpush1.msra.mxu0 %v1316
        %1350 = vmatprep.subr.mxu0 0.0
        %1351 = vmatpush1.msra.mxu0 %v1317
        %1352 = vmatprep.subr.mxu0 0.0
        %1353 = vmatpush1.msra.mxu0 %v1318
        %1354 = vmatprep.subr.mxu0 0.0
        %1355 = vmatpush1.msra.mxu0 %v1319
        %1356 = vmatprep.subr.mxu0 0.0
        %1357 = vmatpush1.msra.mxu0 %v1320
        %1358 = vmatprep.subr.mxu0 0.0
        %1359 = vmatpush1.msra.mxu0 %v1321
        %1360 = vmatprep.subr.mxu0 0.0
        %1361 = vmatpush1.msra.mxu0 %v1322
        %1362 = vmatprep.subr.mxu0 0.0
        %1363 = vmatpush1.msra.mxu0 %v1323
        %1364 = vmatprep.subr.mxu0 0.0
        %1365 = vmatpush1.msra.mxu0 0.0
        %1366 = vmatprep.subr.mxu0 0.0
        %1367 = vmatpush1.msra.mxu0 0.0
        %1368 = vmatprep.subr.mxu0 0.0
        %1369 = vmatpush1.msra.mxu0 0.0
        %1370 = vmatprep.subr.mxu0 0.0
        %1371 = vmatpush1.msra.mxu0 0.0
        %1372 = vmatprep.subr.mxu0 0.0
        %1373 = vmatpush1.msra.mxu0 0.0
        %1374 = vmatprep.subr.mxu0 0.0
        %1375 = vmatpush1.msra.mxu0 0.0
        %1376 = vmatprep.subr.mxu0 0.0
        %1377 = vmatpush1.msra.mxu0 0.0
        %1378 = vmatprep.subr.mxu0 0.0
        %1379 = vmatpush1.msra.mxu0 0.0
        %1380 = vmatprep.subr.mxu0 0.0
        %1381 = vmatpush1.msra.mxu0 0.0
        %1382 = vmatprep.subr.mxu0 0.0
        %1383 = vmatpush1.msra.mxu0 0.0
        %1384 = vmatprep.subr.mxu0 0.0
        %1385 = vmatpush1.msra.mxu0 0.0
        %1386 = vmatprep.subr.mxu0 0.0
        %1387 = vmatpush1.msra.mxu0 0.0
        %1388 = vmatprep.subr.mxu0 0.0
        %1389 = vmatpush1.msra.mxu0 0.0
        %1390 = vmatprep.subr.mxu0 0.0
        %1391 = vmatpush1.msra.mxu0 0.0
        %1392 = vmatprep.subr.mxu0 0.0
        %1393 = vmatpush1.msra.mxu0 0.0
        %1394 = vmatprep.subr.mxu0 0.0
        %1395 = vmatpush1.msra.mxu0 0.0
        %1396 = vmatprep.mubr.f32.mxu0 0.0
        %1397 = vmatmul.mubr.f32.gmra.mrb[0].mxu0 %v1291
        %v1398 = vpop.f32.mrb[0].mxu0
        %v1399 = vadd.f32 %v1330, %v1398
        %v1400 = vpop.f32.mrb[0].mxu0
        %1401 = vmatprep.mubr.f32.mxu0 0.0
        %1402 = vmatmul.mubr.f32.gmra.mrb[0].mxu0 %v1292
        %v1403 = vpop.f32.mrb[0].mxu0
        %v1404 = vadd.f32 %v1330, %v1403
        %v1405 = vpop.f32.mrb[0].mxu0
        %1406 = vmatprep.mubr.f32.mxu0 0.0
        %1407 = vmatmul.mubr.f32.gmra.mrb[0].mxu0 %v1293
        %v1408 = vpop.f32.mrb[0].mxu0
        %v1409 = vadd.f32 %v1330, %v1408
        %v1410 = vpop.f32.mrb[0].mxu0
        %1411 = vmatprep.mubr.f32.mxu0 0.0
        %1412 = vmatmul.mubr.f32.gmra.mrb[0].mxu0 %v1294
        %v1413 = vpop.f32.mrb[0].mxu0
        %v1414 = vadd.f32 %v1330, %v1413
        %v1415 = vpop.f32.mrb[0].mxu0
        %1416 = vmatprep.mubr.f32.mxu0 0.0
        %1417 = vmatmul.mubr.f32.gmra.mrb[0].mxu0 %v1295
        %v1418 = vpop.f32.mrb[0].mxu0
        %v1419 = vadd.f32 %v1330, %v1418
        %v1420 = vpop.f32.mrb[0].mxu0
        %1421 = vmatprep.mubr.f32.mxu0 0.0
        %1422 = vmatmul.mubr.f32.gmra.mrb[0].mxu0 %v1296
        %v1423 = vpop.f32.mrb[0].mxu0
        %v1424 = vadd.f32 %v1330, %v1423
        %v1425 = vpop.f32.mrb[0].mxu0
        %1426 = vmatprep.mubr.f32.mxu0 0.0
        %1427 = vmatmul.mubr.f32.gmra.mrb[0].mxu0 %v1297
        %v1428 = vpop.f32.mrb[0].mxu0
        %v1429 = vadd.f32 %v1330, %v1428
        %v1430 = vpop.f32.mrb[0].mxu0
        %1431 = vmatprep.mubr.f32.mxu0 0.0
        %1432 = vmatmul.mubr.f32.gmra.mrb[0].mxu0 %v1298
        %v1433 = vpop.f32.mrb[0].mxu0
        %v1434 = vadd.f32 %v1330, %v1433
        %v1435 = vpop.f32.mrb[0].mxu0
        %1436 = vmatprep.mubr.f32.mxu0 0.0
        %1437 = vmatmul.mubr.f32.gmra.mrb[0].mxu0 %v1299
        %v1438 = vpop.f32.mrb[0].mxu0
        %v1439 = vadd.f32 %v1330, %v1438
        %v1440 = vpop.f32.mrb[0].mxu0
        %1441 = vmatprep.mubr.f32.mxu0 0.0
        %1442 = vmatmul.mubr.f32.gmra.mrb[0].mxu0 %v1300
        %v1443 = vpop.f32.mrb[0].mxu0
        %v1444 = vadd.f32 %v1330, %v1443
        %v1445 = vpop.f32.mrb[0].mxu0
        %1446 = vmatprep.mubr.f32.mxu0 0.0
        %1447 = vmatmul.mubr.f32.gmra.mrb[0].mxu0 %v1301
        %v1448 = vpop.f32.mrb[0].mxu0
        %v1449 = vadd.f32 %v1330, %v1448
        %v1450 = vpop.f32.mrb[0].mxu0
        %1451 = vmatprep.mubr.f32.mxu0 0.0
        %1452 = vmatmul.mubr.f32.gmra.mrb[0].mxu0 %v1302
        %v1453 = vpop.f32.mrb[0].mxu0
        %v1454 = vadd.f32 %v1330, %v1453
        %v1455 = vpop.f32.mrb[0].mxu0
        %1456 = vmatprep.mubr.f32.mxu0 0.0
        %1457 = vmatmul.mubr.f32.gmra.mrb[0].mxu0 %v1303
        %v1458 = vpop.f32.mrb[0].mxu0
        %v1459 = vadd.f32 %v1330, %v1458
        %v1460 = vpop.f32.mrb[0].mxu0
        %1461 = vmatprep.mubr.f32.mxu0 0.0
        %1462 = vmatmul.mubr.f32.gmra.mrb[0].mxu0 %v1304
        %v1463 = vpop.f32.mrb[0].mxu0
        %v1464 = vadd.f32 %v1330, %v1463
        %v1465 = vpop.f32.mrb[0].mxu0
        %1466 = vmatprep.mubr.f32.mxu0 0.0
        %1467 = vmatmul.mubr.f32.gmra.mrb[0].mxu0 %v1305
        %v1468 = vpop.f32.mrb[0].mxu0
        %v1469 = vadd.f32 %v1330, %v1468
        %v1470 = vpop.f32.mrb[0].mxu0
        %1471 = vmatprep.mubr.f32.mxu0 0.0
        %1472 = vmatmul.mubr.f32.gmra.mrb[0].mxu0 %v1306
        %v1473 = vpop.f32.mrb[0].mxu0
        %v1474 = vadd.f32 %v1330, %v1473
        %v1475 = vpop.f32.mrb[0].mxu0
        %1476 = vdwg.mxu0
        %1477 = vadd.xlane.f32.xlu0 %v1399
        %v1478 = vpop.xlane.xlu0 %1477
        %1479 = vadd.xlane.f32.xlu0 %v1404
        %v1480 = vpop.xlane.xlu0 %1479
        %1481 = vadd.xlane.f32.xlu0 %v1409
        %v1482 = vpop.xlane.xlu0 %1481
        %1483 = vadd.xlane.f32.xlu0 %v1414
        %v1484 = vpop.xlane.xlu0 %1483
        %1485 = vadd.xlane.f32.xlu0 %v1419
        %v1486 = vpop.xlane.xlu0 %1485
        %1487 = vadd.xlane.f32.xlu0 %v1424
        %v1488 = vpop.xlane.xlu0 %1487
        %1489 = vadd.xlane.f32.xlu0 %v1429
        %v1490 = vpop.xlane.xlu0 %1489
        %1491 = vadd.xlane.f32.xlu0 %v1434
        %v1492 = vpop.xlane.xlu0 %1491
        %1493 = vadd.xlane.f32.xlu0 %v1439
        %v1494 = vpop.xlane.xlu0 %1493
        %1495 = vadd.xlane.f32.xlu0 %v1444
        %v1496 = vpop.xlane.xlu0 %1495
        %1497 = vadd.xlane.f32.xlu0 %v1449
        %v1498 = vpop.xlane.xlu0 %1497
        %1499 = vadd.xlane.f32.xlu0 %v1454
        %v1500 = vpop.xlane.xlu0 %1499
        %1501 = vadd.xlane.f32.xlu0 %v1459
        %v1502 = vpop.xlane.xlu0 %1501
        %1503 = vadd.xlane.f32.xlu0 %v1464
        %v1504 = vpop.xlane.xlu0 %1503
        %1505 = vadd.xlane.f32.xlu0 %v1469
        %v1506 = vpop.xlane.xlu0 %1505
        %1507 = vadd.xlane.f32.xlu0 %v1474
        %v1508 = vpop.xlane.xlu0 %1507
        %v1509 = vmul.f32 %v1478, %v422
        %v1510 = vmul.f32 %v1480, %v422
        %v1511 = vmul.f32 %v1482, %v422
        %v1512 = vmul.f32 %v1484, %v422
        %v1513 = vmul.f32 %v1486, %v422
        %v1514 = vmul.f32 %v1488, %v422
        %v1515 = vmul.f32 %v1490, %v422
        %v1516 = vmul.f32 %v1492, %v422
        %v1517 = vmul.f32 %v1494, %v422
        %v1518 = vmul.f32 %v1496, %v422
        %v1519 = vmul.f32 %v1498, %v422
        %v1520 = vmul.f32 %v1500, %v422
        %v1521 = vmul.f32 %v1502, %v422
        %v1522 = vmul.f32 %v1504, %v422
        %v1523 = vmul.f32 %v1506, %v422
        %v1524 = vmul.f32 %v1508, %v422
        %v1525 = vsub.f32 %v1399, %v1509
        %v1526 = vsub.f32 %v1404, %v1510
        %v1527 = vsub.f32 %v1409, %v1511
        %v1528 = vsub.f32 %v1414, %v1512
        %v1529 = vsub.f32 %v1419, %v1513
        %v1530 = vsub.f32 %v1424, %v1514
        %v1531 = vsub.f32 %v1429, %v1515
        %v1532 = vsub.f32 %v1434, %v1516
        %v1533 = vsub.f32 %v1439, %v1517
        %v1534 = vsub.f32 %v1444, %v1518
        %v1535 = vsub.f32 %v1449, %v1519
        %v1536 = vsub.f32 %v1454, %v1520
        %v1537 = vsub.f32 %v1459, %v1521
        %v1538 = vsub.f32 %v1464, %v1522
        %v1539 = vsub.f32 %v1469, %v1523
        %v1540 = vsub.f32 %v1474, %v1524
        %v1541 = vmul.f32 %v1525, %v1525
        %v1542 = vmul.f32 %v1526, %v1526
        %v1543 = vmul.f32 %v1527, %v1527
        %v1544 = vmul.f32 %v1528, %v1528
        %v1545 = vmul.f32 %v1529, %v1529
        %v1546 = vmul.f32 %v1530, %v1530
        %v1547 = vmul.f32 %v1531, %v1531
        %v1548 = vmul.f32 %v1532, %v1532
        %v1549 = vmul.f32 %v1533, %v1533
        %v1550 = vmul.f32 %v1534, %v1534
        %v1551 = vmul.f32 %v1535, %v1535
        %v1552 = vmul.f32 %v1536, %v1536
        %v1553 = vmul.f32 %v1537, %v1537
        %v1554 = vmul.f32 %v1538, %v1538
        %v1555 = vmul.f32 %v1539, %v1539
        %v1556 = vmul.f32 %v1540, %v1540
        %1557 = vadd.xlane.f32.xlu0 %v1541
        %v1558 = vpop.xlane.xlu0 %1557
        %1559 = vadd.xlane.f32.xlu0 %v1542
        %v1560 = vpop.xlane.xlu0 %1559
        %1561 = vadd.xlane.f32.xlu0 %v1543
        %v1562 = vpop.xlane.xlu0 %1561
        %1563 = vadd.xlane.f32.xlu0 %v1544
        %v1564 = vpop.xlane.xlu0 %1563
        %1565 = vadd.xlane.f32.xlu0 %v1545
        %v1566 = vpop.xlane.xlu0 %1565
        %1567 = vadd.xlane.f32.xlu0 %v1546
        %v1568 = vpop.xlane.xlu0 %1567
        %1569 = vadd.xlane.f32.xlu0 %v1547
        %v1570 = vpop.xlane.xlu0 %1569
        %1571 = vadd.xlane.f32.xlu0 %v1548
        %v1572 = vpop.xlane.xlu0 %1571
        %1573 = vadd.xlane.f32.xlu0 %v1549
        %v1574 = vpop.xlane.xlu0 %1573
        %1575 = vadd.xlane.f32.xlu0 %v1550
        %v1576 = vpop.xlane.xlu0 %1575
        %1577 = vadd.xlane.f32.xlu0 %v1551
        %v1578 = vpop.xlane.xlu0 %1577
        %1579 = vadd.xlane.f32.xlu0 %v1552
        %v1580 = vpop.xlane.xlu0 %1579
        %1581 = vadd.xlane.f32.xlu0 %v1553
        %v1582 = vpop.xlane.xlu0 %1581
        %1583 = vadd.xlane.f32.xlu0 %v1554
        %v1584 = vpop.xlane.xlu0 %1583
        %1585 = vadd.xlane.f32.xlu0 %v1555
        %v1586 = vpop.xlane.xlu0 %1585
        %1587 = vadd.xlane.f32.xlu0 %v1556
        %v1588 = vpop.xlane.xlu0 %1587
        %v1589 = vmul.f32 %v1558, %v422
        %v1590 = vmul.f32 %v1560, %v422
        %v1591 = vmul.f32 %v1562, %v422
        %v1592 = vmul.f32 %v1564, %v422
        %v1593 = vmul.f32 %v1566, %v422
        %v1594 = vmul.f32 %v1568, %v422
        %v1595 = vmul.f32 %v1570, %v422
        %v1596 = vmul.f32 %v1572, %v422
        %v1597 = vmul.f32 %v1574, %v422
        %v1598 = vmul.f32 %v1576, %v422
        %v1599 = vmul.f32 %v1578, %v422
        %v1600 = vmul.f32 %v1580, %v422
        %v1601 = vmul.f32 %v1582, %v422
        %v1602 = vmul.f32 %v1584, %v422
        %v1603 = vmul.f32 %v1586, %v422
        %v1604 = vmul.f32 %v1588, %v422
        %v1605 = vadd.f32 %v1589, 1e-05
        %v1606 = vadd.f32 %v1590, 1e-05
        %v1607 = vadd.f32 %v1591, 1e-05
        %v1608 = vadd.f32 %v1592, 1e-05
        %v1609 = vadd.f32 %v1593, 1e-05
        %v1610 = vadd.f32 %v1594, 1e-05
        %v1611 = vadd.f32 %v1595, 1e-05
        %v1612 = vadd.f32 %v1596, 1e-05
        %v1613 = vadd.f32 %v1597, 1e-05
        %v1614 = vadd.f32 %v1598, 1e-05
        %v1615 = vadd.f32 %v1599, 1e-05
        %v1616 = vadd.f32 %v1600, 1e-05
        %v1617 = vadd.f32 %v1601, 1e-05
        %v1618 = vadd.f32 %v1602, 1e-05
        %v1619 = vadd.f32 %v1603, 1e-05
        %v1620 = vadd.f32 %v1604, 1e-05
        %v1621 = vrsqrt.pop %v1605
        %v1622 = vrsqrt.pop %v1606
        %v1623 = vrsqrt.pop %v1607
        %v1624 = vrsqrt.pop %v1608
        %v1625 = vrsqrt.pop %v1609
        %v1626 = vrsqrt.pop %v1610
        %v1627 = vrsqrt.pop %v1611
        %v1628 = vrsqrt.pop %v1612
        %v1629 = vrsqrt.pop %v1613
        %v1630 = vrsqrt.pop %v1614
        %v1631 = vrsqrt.pop %v1615
        %v1632 = vrsqrt.pop %v1616
        %v1633 = vrsqrt.pop %v1617
        %v1634 = vrsqrt.pop %v1618
        %v1635 = vrsqrt.pop %v1619
        %v1636 = vrsqrt.pop %v1620
        %v1637 = vmul.f32 %v1525, %v1621
        %v1638 = vmul.f32 %v1526, %v1622
        %v1639 = vmul.f32 %v1527, %v1623
        %v1640 = vmul.f32 %v1528, %v1624
        %v1641 = vmul.f32 %v1529, %v1625
        %v1642 = vmul.f32 %v1530, %v1626
        %v1643 = vmul.f32 %v1531, %v1627
        %v1644 = vmul.f32 %v1532, %v1628
        %v1645 = vmul.f32 %v1533, %v1629
        %v1646 = vmul.f32 %v1534, %v1630
        %v1647 = vmul.f32 %v1535, %v1631
        %v1648 = vmul.f32 %v1536, %v1632
        %v1649 = vmul.f32 %v1537, %v1633
        %v1650 = vmul.f32 %v1538, %v1634
        %v1651 = vmul.f32 %v1539, %v1635
        %v1652 = vmul.f32 %v1540, %v1636
        %v1653 = vmax.f32 %v1637, 0.0
        %v1654 = vmax.f32 %v1638, 0.0
        %v1655 = vmax.f32 %v1639, 0.0
        %v1656 = vmax.f32 %v1640, 0.0
        %v1657 = vmax.f32 %v1641, 0.0
        %v1658 = vmax.f32 %v1642, 0.0
        %v1659 = vmax.f32 %v1643, 0.0
        %v1660 = vmax.f32 %v1644, 0.0
        %v1661 = vmax.f32 %v1645, 0.0
        %v1662 = vmax.f32 %v1646, 0.0
        %v1663 = vmax.f32 %v1647, 0.0
        %v1664 = vmax.f32 %v1648, 0.0
        %v1665 = vmax.f32 %v1649, 0.0
        %v1666 = vmax.f32 %v1650, 0.0
        %v1667 = vmax.f32 %v1651, 0.0
        %v1668 = vmax.f32 %v1652, 0.0
        %1669 = vst [vmem:[%s203] sm:$0xff] %v1653
        %1670 = vst [vmem:[%s203 + $0x8] sm:$0xff] %v1654
        %1671 = vst [vmem:[%s203 + $0x10] sm:$0xff] %v1655
        %1672 = vst [vmem:[%s203 + $0x18] sm:$0xff] %v1656
        %1673 = vst [vmem:[%s203 + $0x20] sm:$0xff] %v1657
        %1674 = vst [vmem:[%s203 + $0x28] sm:$0xff] %v1658
        %1675 = vst [vmem:[%s203 + $0x30] sm:$0xff] %v1659
        %1676 = vst [vmem:[%s203 + $0x38] sm:$0xff] %v1660
        %1677 = vst [vmem:[%s203 + $0x40] sm:$0xff] %v1661
        %1678 = vst [vmem:[%s203 + $0x48] sm:$0xff] %v1662
        %1679 = vst [vmem:[%s203 + $0x50] sm:$0xff] %v1663
        %1680 = vst [vmem:[%s203 + $0x58] sm:$0xff] %v1664
        %1681 = vst [vmem:[%s203 + $0x60] sm:$0xff] %v1665
        %1682 = vst [vmem:[%s203 + $0x68] sm:$0xff] %v1666
        %1683 = vst [vmem:[%s203 + $0x70] sm:$0xff] %v1667
        %1684 = vst [vmem:[%s203 + $0x78] sm:$0xff] %v1668
        %s1685 = sand.u32 %s97, 1
        %s1686 = scalar_lea.sflag [#allocation4], %s1685
        %s1687 = sand.u32 %s97, 1
        %s1688 = smul.addr %s1687, 128
        %s1689 = scalar_lea.vmem [#allocation7], %s1688
        // Predicated region
        $region41: #{seqnn_forward.1} parent=31 // pred_check
          %p1690 = pneg %p107
        $region42: #{seqnn_forward.1} parent=31 // pred_check_branch
          %1692 = sbr.rel (%p1690) target = $region44
        $region43: #{seqnn_forward.1} parent=31 // pred_region
          %s1693 = smul.u32 16, %s21
          %s1695 = ssub.s32 2048, 2048
          %1696 = vsyncadd %s1686, %s1695
          %s1697 = smul.addr %s1693, 128
          %s1698 = scalar_lea.hbm %s3, %s1697
          %s1699 = sshll.u32 %s1689, 4
          %s1700 = int_to_ptr.vmem [resolvable:$true] %s1699
          %1705 = dma.vmem_to_hbm [thread:$0]  %s1700, 2048, %s1698, %s1686, 128, 128, 8
        $region44: #{seqnn_forward.1} parent=31 // pred_fallthru
          _
      $region32: #{seqnn_forward.1} parent=5 // pred_fallthru
        _
      %p1706 = scmp.le.s32.totalorder 2, %s16
      // Predicated region
      $region45: #{seqnn_forward.1} parent=5 // pred_check
        %p1707 = pneg %p1706
      $region46: #{seqnn_forward.1} parent=5 // pred_check_branch
        %1709 = sbr.rel (%p1707) target = $region48
      $region47: #{seqnn_forward.1} parent=5 // pred_region
        %s1710 = ssub.s32 %s16, 2
        // Predicated region
        $region49: #{seqnn_forward.1} parent=47 // pred_check
          %p1711 = pneg %p113
        $region50: #{seqnn_forward.1} parent=47 // pred_check_branch
          %1713 = sbr.rel (%p1711) target = $region52
        $region51: #{seqnn_forward.1} parent=47 // pred_region
          %s1714 = sand.u32 %s98, 1
          %s1715 = scalar_lea.sflag [#allocation4], %s1714
          %s1716 = sand.u32 %s98, 1
          %s1717 = smul.addr %s1716, 128
          %s1718 = scalar_lea.vmem [#allocation7], %s1717
          %1719 = dma.done %s1715, 2048
        $region52: #{seqnn_forward.1} parent=47 // pred_fallthru
          _
      $region48: #{seqnn_forward.1} parent=5 // pred_fallthru
        _
    $region6: #{seqnn_forward.1} parent=1 // loop_footer
      %s20 = sadd.s32 1, %s16
    $region7: #{seqnn_forward.1} parent=1 // loop_footer_branch
      %15 = sbr.rel target = $region3
    $region8: #{seqnn_forward.1} parent=1 // loop_exit
      _
    %1720 = vsyncpa [#allocation3], 1
    %s1721 = scalar_lea.sflag [#allocation3], 1
    %1722 = vsyncpa %s1721, 1
    %1723 = vsyncpa [#allocation6], 1
    %1724 = vsyncpa [#allocation4], 1
    %s1725 = scalar_lea.sflag [#allocation4], 1
    %1726 = vsyncpa %s1725, 1

</llo_original>
